<compile_context>
chip_gen: v6e
topology: v6e:2x2x1
jax: 0.10.0
libtpu: 0.0.40
codegen_flags: <defaults>
</compile_context>

<pallas_src>
import math

import jax
import jax.numpy as jnp
from jax.experimental import pallas as pl
from jax.experimental.pallas import tpu as pltpu


# ---------------------------------------------------------------------------
# In-kernel math helpers (traced inside the Pallas kernel body).
# ---------------------------------------------------------------------------
def _fast_recip(x):
    # EUP approximate reciprocal + one Newton-Raphson refinement: the divide
    # leaves the VALU slot and the refinement restores ~f32 accuracy.
    r = pl.reciprocal(x, approx=True)
    return r * (2.0 - x * r)


def _erf(x):
    # Abramowitz & Stegun 7.1.26 rational approximation of erf, |err| <= 1.5e-7.
    # Used for the torch-exact GELU path (approx_gelu=False).
    a1, a2, a3, a4, a5 = (0.254829592, -0.284496736, 1.421413741,
                          -1.453152027, 1.061405429)
    p = 0.3275911
    s = jnp.where(x >= 0.0, 1.0, -1.0)
    ax = jnp.abs(x)
    t = _fast_recip(1.0 + p * ax)
    poly = ((((a5 * t + a4) * t + a3) * t + a2) * t + a1) * t
    return s * (1.0 - poly * jnp.exp(-ax * ax))


def _gelu_exact(x):
    # Matches torch.nn.GELU() (exact / erf variant) to ~1e-6.
    return 0.5 * x * (1.0 + _erf(x * (1.0 / math.sqrt(2.0))))


def _gelu_tanh(x):
    # tanh-approximation GELU: ~5x fewer VALU ops than the erf polynomial; the
    # tanh goes to the otherwise idle EUP.  Deviates from torch exact GELU by
    # up to ~1e-3 absolute (documented; gate with approx_gelu=False if needed).
    c = math.sqrt(2.0 / math.pi)
    return 0.5 * x * (1.0 + jnp.tanh(c * (x + 0.044715 * x * x * x)))


def _layernorm_cols(x, gamma_b, beta_b, eps=1e-5):
    # LayerNorm over the feature axis (axis 0 = sublanes); each lane column is
    # one (batch*patch, marker) item.  Biased variance, eps inside rsqrt —
    # torch.nn.LayerNorm semantics.
    mu = jnp.mean(x, axis=0, keepdims=True)             # XLU sublane reduce
    xc = x - mu
    var = jnp.mean(xc * xc, axis=0, keepdims=True)
    return xc * jax.lax.rsqrt(var + eps) * gamma_b + beta_b


# ---------------------------------------------------------------------------
# Pallas kernel factory: one (batch index, patch tile) block; full marker axis.
# Activations are stacked as (features, m*tile_p): features on sublanes, all
# markers' items concatenated along lanes so each projection is ONE MXU call.
# ---------------------------------------------------------------------------
def _make_kernel(approx_gelu, matmul_in_bf16):
    gelu = _gelu_tanh if approx_gelu else _gelu_exact

    def mxu_dot(w, a):
        if matmul_in_bf16:
            # Explicit bf16 operands -> deterministic single MXU pass, f32 acc.
            return jnp.dot(w.astype(jnp.bfloat16), a.astype(jnp.bfloat16),
                           preferred_element_type=jnp.float32)
        return jnp.dot(w, a, preferred_element_type=jnp.float32)

    def kernel(x_ref, wd_ref, bd_ref, wqkv_ref, bqkv_ref, wu_ref, bu_ref,
               g1_ref, be1_ref, g2_ref, be2_ref, out_ref, attn_ref):
        _, M, E, T = x_ref.shape
        H = wd_ref.shape[0]
        N = M * T
        inv_scale = 1.0 / math.sqrt(H)

        # Stack all markers along the lane axis -> (E, M*T).
        x_cat = jnp.concatenate(
            [x_ref[0, mk].astype(jnp.float32) for mk in range(M)], axis=1)

        # Hoisted lane-broadcasts of (dim, 1) bias / LayerNorm params (emitted
        # once, not inside any per-marker loop).
        bd = jnp.broadcast_to(bd_ref[...], (H, N))
        bqkv = jnp.broadcast_to(bqkv_ref[...], (3 * H, N))
        bu = jnp.broadcast_to(bu_ref[...], (E, N))
        g1 = jnp.broadcast_to(g1_ref[...], (H, N))
        be1 = jnp.broadcast_to(be1_ref[...], (H, N))
        g2 = jnp.broadcast_to(g2_ref[...], (E, N))
        be2 = jnp.broadcast_to(be2_ref[...], (E, N))

        # (1) lin_down + GELU : one MXU call across all markers.
        h_cat = gelu(mxu_dot(wd_ref[...], x_cat) + bd)            # (H, N) skip1
        # (2) fused QKV projection : one MXU call across all markers.
        qkv_cat = mxu_dot(wqkv_ref[...], h_cat) + bqkv            # (3H, N)
        q_cat = qkv_cat[0:H, :] * inv_scale                       # fold 1/sqrt(H)
        k_cat = qkv_cat[H:2 * H, :]
        v_cat = qkv_cat[2 * H:3 * H, :]

        def blk(a, mk):                                           # lane-aligned slice
            return a[:, mk * T:(mk + 1) * T]

        # ---- marker self-attention on VPU/XLU (no tiny per-item MXU matmuls) ----
        attn_rows = []                                            # qm-major, km-minor
        o_blocks = []
        for qm in range(M):
            s = [jnp.sum(blk(q_cat, qm) * blk(k_cat, km), axis=0, keepdims=True)
                 for km in range(M)]                              # M x (1, T)
            mx = s[0]
            for km in range(1, M):
                mx = jnp.maximum(mx, s[km])
            ex = [jnp.exp(sk - mx) for sk in s]
            den = ex[0]
            for km in range(1, M):
                den = den + ex[km]
            r = _fast_recip(den)                                  # (1, T)
            o = None
            for km in range(M):
                a = ex[km] * r                                    # (1, T)
                attn_rows.append(a)
                av = a * blk(v_cat, km)                           # (H, T)
                o = av if o is None else o + av
            o_blocks.append(o)

        # Single dense (M*M, T) attention-map store (no masked per-row stores).
        attn_ref[0] = jnp.concatenate(attn_rows, axis=0).astype(attn_ref.dtype)

        # ---- residual MLP path, batched over all markers -------------------------
        o_cat = jnp.concatenate(o_blocks, axis=1)                 # (H, N)
        y_cat = _layernorm_cols(o_cat + h_cat, g1, be1)           # skip1 + LN(hidden)
        # (3) lin_up : one MXU call across all markers.
        z_cat = gelu(mxu_dot(wu_ref[...], y_cat) + bu) + x_cat    # GELU + skip2
        z_cat = _layernorm_cols(z_cat, g2, be2)                   # LN(embedding)

        # mean-pool over the marker axis; (E, T) store is fully lane/sublane dense.
        pooled = blk(z_cat, 0)
        for mk in range(1, M):
            pooled = pooled + blk(z_cat, mk)
        out_ref[0] = (pooled * (1.0 / M)).astype(out_ref.dtype)

    return kernel


# ---------------------------------------------------------------------------
# Wrapper: tiles the original (b, m, e, p) layout directly; no input transpose.
# ---------------------------------------------------------------------------
def _pick_tile_p(p, max_tile_p, batch):
    # Largest multiple-of-128 divisor of p, capped at max_tile_p; fall back to
    # the full axis (block dim == array dim is always legal) if p is unaligned.
    if p % 128 != 0:
        return p
    t = 128
    while t * 2 <= max_tile_p and p % (t * 2) == 0:
        t *= 2
    # Keep at least 2 parallel grid steps so v7x's two TensorCores both get work.
    while batch * (p // t) < 2 and t % 256 == 0:
        t //= 2
    return t


def marker_attention(x, params, *, max_tile_p=2048, approx_gelu=True,
                     matmul_in_bf16=True, x_hbm_dtype=None):
    if x_hbm_dtype is not None:
        # e.g. jnp.bfloat16: halves x HBM traffic (main win on v5e, free DMA/VMEM
        # win on v6e/v7x); the kernel upcasts to f32 internally.
        x = x.astype(x_hbm_dtype)

    b, m, e, p = x.shape
    tile_p = _pick_tile_p(p, max(max_tile_p, 128), b)
    grid = (b, p // tile_p)          # both axes independent -> fully parallel

    def const2(ib, ip):
        return (0, 0)

    in_specs = [
        pl.BlockSpec((1, m, e, tile_p), lambda ib, ip: (ib, 0, 0, ip)),
        pl.BlockSpec(params['w_down'].shape, const2),
        pl.BlockSpec(params['b_down'].shape, const2),
        pl.BlockSpec(params['w_qkv'].shape, const2),
        pl.BlockSpec(params['b_qkv'].shape, const2),
        pl.BlockSpec(params['w_up'].shape, const2),
        pl.BlockSpec(params['b_up'].shape, const2),
        pl.BlockSpec(params['g1'].shape, const2),
        pl.BlockSpec(params['be1'].shape, const2),
        pl.BlockSpec(params['g2'].shape, const2),
        pl.BlockSpec(params['be2'].shape, const2),
    ]
    out_specs = [
        pl.BlockSpec((1, e, tile_p), lambda ib, ip: (ib, 0, ip)),        # pooled
        pl.BlockSpec((1, m * m, tile_p), lambda ib, ip: (ib, 0, ip)),    # attn
    ]
    out_shape = [
        jax.ShapeDtypeStruct((b, e, p), jnp.float32),
        jax.ShapeDtypeStruct((b, m * m, p), jnp.float32),
    ]

    kernel = _make_kernel(approx_gelu, matmul_in_bf16)
    pooled_ep, attn_mp = pl.pallas_call(
        kernel,
        grid=grid,
        in_specs=in_specs,
        out_specs=out_specs,
        out_shape=out_shape,
        compiler_params=pltpu.CompilerParams(
            dimension_semantics=("parallel", "parallel")),
    )(x, params['w_down'], params['b_down'], params['w_qkv'], params['b_qkv'],
      params['w_up'], params['b_up'], params['g1'], params['be1'],
      params['g2'], params['be2'])

    # Cheap wrapper-side transposes of the (small) lane-dense outputs back to
    # the PyTorch shapes: (b, p, e) pooled and (b*p, m, m) attention.
    pooled = jnp.transpose(pooled_ep, (0, 2, 1))
    attn = jnp.transpose(attn_mp, (0, 2, 1)).reshape(b * p, m, m)
    return pooled, attn


# ---------------------------------------------------------------------------
# Deterministic parameter init.  Weights kept in torch (out, in) convention;
# biases / LN params stored as (dim, 1) columns so they broadcast along lanes.
# ---------------------------------------------------------------------------
def init_params(key, embedding_dim, hidden_dim):
    ks = jax.random.split(key, 7)

    def linear(k, fan_in, fan_out):
        bound = 1.0 / math.sqrt(fan_in)
        kw, kb = jax.random.split(k)
        w = jax.random.uniform(kw, (fan_out, fan_in), jnp.float32, -bound, bound)
        b = jax.random.uniform(kb, (fan_out, 1), jnp.float32, -bound, bound)
        return w, b

    w_down, b_down = linear(ks[0], embedding_dim, hidden_dim)
    w_qkv, b_qkv = linear(ks[1], hidden_dim, 3 * hidden_dim)
    w_up, b_up = linear(ks[2], hidden_dim, embedding_dim)
    g1 = 1.0 + 0.05 * jax.random.normal(ks[3], (hidden_dim, 1), jnp.float32)
    be1 = 0.05 * jax.random.normal(ks[4], (hidden_dim, 1), jnp.float32)
    g2 = 1.0 + 0.05 * jax.random.normal(ks[5], (embedding_dim, 1), jnp.float32)
    be2 = 0.05 * jax.random.normal(ks[6], (embedding_dim, 1), jnp.float32)
    return dict(w_down=w_down, b_down=b_down, w_qkv=w_qkv, b_qkv=b_qkv,
                w_up=w_up, b_up=b_up, g1=g1, be1=be1, g2=g2, be2=be2)


# ---------------------------------------------------------------------------
# Pure-JAX reference (mirrors the PyTorch forward).  approximate_gelu /
# matmul_dtype let it match the kernel's fast-path numerics exactly, so the
# tight tolerance check compares apples to apples.
# ---------------------------------------------------------------------------
def reference(x, params, *, approximate_gelu=False, matmul_dtype=None):
    b, m, e, p = x.shape
    H = params['w_down'].shape[0]
    hi = jax.lax.Precision.HIGHEST

    def mm(lhs, w):
        if matmul_dtype is not None:
            lhs = lhs.astype(matmul_dtype)
            w = w.astype(matmul_dtype)
        return jnp.einsum('nmi,oi->nmo', lhs, w,
                          preferred_element_type=jnp.float32)

    xr = jnp.transpose(x, (0, 3, 1, 2)).reshape(b * p, m, e).astype(jnp.float32)
    skip2 = xr
    h = mm(xr, params['w_down']) + params['b_down'][:, 0]
    h = jax.nn.gelu(h, approximate=approximate_gelu)
    skip1 = h
    qkv = mm(h, params['w_qkv']) + params['b_qkv'][:, 0]
    q, k, v = qkv[..., :H], qkv[..., H:2 * H], qkv[..., 2 * H:]
    prod = jnp.einsum('nqh,nkh->nqk', q, k, precision=hi) / math.sqrt(H)
    attn = jax.nn.softmax(prod, axis=-1)
    opt = jnp.einsum('nqk,nkh->nqh', attn, v, precision=hi)

    def ln(z, g, be, eps=1e-5):
        mu = jnp.mean(z, axis=-1, keepdims=True)
        var = jnp.mean((z - mu) ** 2, axis=-1, keepdims=True)
        return (z - mu) / jnp.sqrt(var + eps) * g + be

    y = ln(opt + skip1, params['g1'][:, 0], params['be1'][:, 0])
    z = mm(y, params['w_up']) + params['b_up'][:, 0]
    z = jax.nn.gelu(z, approximate=approximate_gelu)
    z = ln(z + skip2, params['g2'][:, 0], params['be2'][:, 0])
    z = z.reshape(b, p, m, e)
    return jnp.mean(z, axis=2), attn


if __name__ == "__main__":
    # Small shapes consistent with the module: batch=2, markers=4,
    # embedding_dim=32, hidden_dim=16, patches=256 (exercises the 128-lane tiling).
    b, m, e, p = 2, 4, 32, 256
    hidden_dim = 16

    key = jax.random.PRNGKey(0)
    kx, kx2, kp = jax.random.split(key, 3)
    x = jax.random.normal(kx, (b, m, e, p), jnp.float32)
    params = init_params(kp, e, hidden_dim)

    # --- fast path (default): tanh GELU + bf16 MXU operands -------------------
    # max_tile_p=128 keeps a (2, 2) grid at this demo size so the multi-tile
    # patch path is exercised; production callers should leave the default.
    pooled, attn = marker_attention(x, params, max_tile_p=128)
    pooled = jax.block_until_ready(pooled)
    attn = jax.block_until_ready(attn)
    assert pooled.shape == (b, p, e) and attn.shape == (b * p, m, m)

    # Tight check against a reference with matched numerics (tanh GELU, bf16
    # matmul operands, f32 accumulation).
    ref_pooled, ref_attn = reference(x, params, approximate_gelu=True,
                                     matmul_dtype=jnp.bfloat16)
    assert jnp.allclose(pooled, ref_pooled, atol=2e-3, rtol=2e-3)
    assert jnp.allclose(attn, ref_attn, atol=2e-3, rtol=2e-3)

    # Looser sanity check against the torch-exact semantics (erf GELU, f32
    # matmuls): the documented deviation of the fast path (bf16 operands +
    # tanh GELU) stays well inside a few 1e-2.
    ex_pooled, ex_attn = reference(x, params, approximate_gelu=False,
                                   matmul_dtype=None)
    assert jnp.allclose(pooled, ex_pooled, atol=5e-2, rtol=5e-2)
    assert jnp.allclose(attn, ex_attn, atol=5e-2, rtol=5e-2)

    # --- small-p fallback path (tile_p == full p, p % 128 != 0), fast path ----
    p2 = 8
    x2 = jax.random.normal(kx2, (b, m, e, p2), jnp.float32)
    pooled2, attn2 = marker_attention(x2, params)
    pooled2 = jax.block_until_ready(pooled2)
    attn2 = jax.block_until_ready(attn2)
    ref_pooled2, ref_attn2 = reference(x2, params, approximate_gelu=True,
                                       matmul_dtype=jnp.bfloat16)
    assert jnp.allclose(pooled2, ref_pooled2, atol=2e-3, rtol=2e-3)
    assert jnp.allclose(attn2, ref_attn2, atol=2e-3, rtol=2e-3)

    # --- torch-exact kernel mode (erf GELU, f32 matmuls) on the same shape ----
    pooled3, attn3 = marker_attention(x2, params, approx_gelu=False,
                                      matmul_in_bf16=False)
    pooled3 = jax.block_until_ready(pooled3)
    attn3 = jax.block_until_ready(attn3)
    ref_pooled3, ref_attn3 = reference(x2, params, approximate_gelu=False,
                                       matmul_dtype=None)
    assert jnp.allclose(pooled3, ref_pooled3, atol=2e-3, rtol=2e-3)
    assert jnp.allclose(attn3, ref_attn3, atol=2e-3, rtol=2e-3)

    print("KERNEL_OK")
</pallas_src>

<mosaic_0001>
module attributes {stable_mosaic.version = 11 : i64} {
  func.func @kernel(%arg0: i32, %arg1: i32, %arg2: memref<1x4x32x128xf32, #tpu.memory_space<vmem>>, %arg3: memref<16x32xf32, #tpu.memory_space<vmem>>, %arg4: memref<16x1xf32, #tpu.memory_space<vmem>>, %arg5: memref<48x16xf32, #tpu.memory_space<vmem>>, %arg6: memref<48x1xf32, #tpu.memory_space<vmem>>, %arg7: memref<32x16xf32, #tpu.memory_space<vmem>>, %arg8: memref<32x1xf32, #tpu.memory_space<vmem>>, %arg9: memref<16x1xf32, #tpu.memory_space<vmem>>, %arg10: memref<16x1xf32, #tpu.memory_space<vmem>>, %arg11: memref<32x1xf32, #tpu.memory_space<vmem>>, %arg12: memref<32x1xf32, #tpu.memory_space<vmem>>, %arg13: memref<1x32x128xf32, #tpu.memory_space<vmem>>, %arg14: memref<1x16x128xf32, #tpu.memory_space<vmem>>) attributes {dimension_semantics = [#tpu.dimension_semantics<parallel>, #tpu.dimension_semantics<parallel>], iteration_bounds = array<i64: 2, 2>, scalar_prefetch = 0 : i64, scratch_operands = 0 : i64, tpu.core_type = #tpu.core_type<tc>, window_params = [{transform_indices = @transform_0, window_bounds = array<i64: 1, 4, 32, 128>}, {pipeline_mode = #tpu.pipeline_mode<synchronous>, transform_indices = @transform_1, window_bounds = array<i64: 16, 32>}, {pipeline_mode = #tpu.pipeline_mode<synchronous>, transform_indices = @transform_2, window_bounds = array<i64: 16, 1>}, {pipeline_mode = #tpu.pipeline_mode<synchronous>, transform_indices = @transform_3, window_bounds = array<i64: 48, 16>}, {pipeline_mode = #tpu.pipeline_mode<synchronous>, transform_indices = @transform_4, window_bounds = array<i64: 48, 1>}, {pipeline_mode = #tpu.pipeline_mode<synchronous>, transform_indices = @transform_5, window_bounds = array<i64: 32, 16>}, {pipeline_mode = #tpu.pipeline_mode<synchronous>, transform_indices = @transform_6, window_bounds = array<i64: 32, 1>}, {pipeline_mode = #tpu.pipeline_mode<synchronous>, transform_indices = @transform_7, window_bounds = array<i64: 16, 1>}, {pipeline_mode = #tpu.pipeline_mode<synchronous>, transform_indices = @transform_8, window_bounds = array<i64: 16, 1>}, {pipeline_mode = #tpu.pipeline_mode<synchronous>, transform_indices = @transform_9, window_bounds = array<i64: 32, 1>}, {pipeline_mode = #tpu.pipeline_mode<synchronous>, transform_indices = @transform_10, window_bounds = array<i64: 32, 1>}, {transform_indices = @transform_11, window_bounds = array<i64: 1, 32, 128>}, {transform_indices = @transform_12, window_bounds = array<i64: 1, 16, 128>}]} {
    %c0 = arith.constant 0 : index
    %c0_0 = arith.constant 0 : index
    %c0_1 = arith.constant 0 : index
    %c0_2 = arith.constant 0 : index
    %0 = vector.load %arg2[%c0, %c0_0, %c0_1, %c0_2] : memref<1x4x32x128xf32, #tpu.memory_space<vmem>>, vector<1x1x32x128xf32>
    %1 = vector.shape_cast %0 : vector<1x1x32x128xf32> to vector<32x128xf32>
    %c0_3 = arith.constant 0 : index
    %c1 = arith.constant 1 : index
    %c0_4 = arith.constant 0 : index
    %c0_5 = arith.constant 0 : index
    %2 = vector.load %arg2[%c0_3, %c1, %c0_4, %c0_5] : memref<1x4x32x128xf32, #tpu.memory_space<vmem>>, vector<1x1x32x128xf32>
    %3 = vector.shape_cast %2 : vector<1x1x32x128xf32> to vector<32x128xf32>
    %c0_6 = arith.constant 0 : index
    %c2 = arith.constant 2 : index
    %c0_7 = arith.constant 0 : index
    %c0_8 = arith.constant 0 : index
    %4 = vector.load %arg2[%c0_6, %c2, %c0_7, %c0_8] : memref<1x4x32x128xf32, #tpu.memory_space<vmem>>, vector<1x1x32x128xf32>
    %5 = vector.shape_cast %4 : vector<1x1x32x128xf32> to vector<32x128xf32>
    %c0_9 = arith.constant 0 : index
    %c3 = arith.constant 3 : index
    %c0_10 = arith.constant 0 : index
    %c0_11 = arith.constant 0 : index
    %6 = vector.load %arg2[%c0_9, %c3, %c0_10, %c0_11] : memref<1x4x32x128xf32, #tpu.memory_space<vmem>>, vector<1x1x32x128xf32>
    %7 = vector.shape_cast %6 : vector<1x1x32x128xf32> to vector<32x128xf32>
    %8 = tpu.concatenate %1, %3, %5, %7 in 1 : vector<32x128xf32>, vector<32x128xf32>, vector<32x128xf32>, vector<32x128xf32> -> vector<32x512xf32>
    %c0_12 = arith.constant 0 : index
    %c0_13 = arith.constant 0 : index
    %9 = vector.load %arg4[%c0_12, %c0_13] : memref<16x1xf32, #tpu.memory_space<vmem>>, vector<16x1xf32>
    %10 = vector.shape_cast %9 : vector<16x1xf32> to vector<16x1xf32>
    %11 = vector.broadcast %10 : vector<16x1xf32> to vector<16x512xf32>
    %c0_14 = arith.constant 0 : index
    %c0_15 = arith.constant 0 : index
    %12 = vector.load %arg6[%c0_14, %c0_15] : memref<48x1xf32, #tpu.memory_space<vmem>>, vector<48x1xf32>
    %13 = vector.shape_cast %12 : vector<48x1xf32> to vector<48x1xf32>
    %14 = vector.broadcast %13 : vector<48x1xf32> to vector<48x512xf32>
    %c0_16 = arith.constant 0 : index
    %c0_17 = arith.constant 0 : index
    %15 = vector.load %arg8[%c0_16, %c0_17] : memref<32x1xf32, #tpu.memory_space<vmem>>, vector<32x1xf32>
    %16 = vector.shape_cast %15 : vector<32x1xf32> to vector<32x1xf32>
    %17 = vector.broadcast %16 : vector<32x1xf32> to vector<32x512xf32>
    %c0_18 = arith.constant 0 : index
    %c0_19 = arith.constant 0 : index
    %18 = vector.load %arg9[%c0_18, %c0_19] : memref<16x1xf32, #tpu.memory_space<vmem>>, vector<16x1xf32>
    %19 = vector.shape_cast %18 : vector<16x1xf32> to vector<16x1xf32>
    %20 = vector.broadcast %19 : vector<16x1xf32> to vector<16x512xf32>
    %c0_20 = arith.constant 0 : index
    %c0_21 = arith.constant 0 : index
    %21 = vector.load %arg10[%c0_20, %c0_21] : memref<16x1xf32, #tpu.memory_space<vmem>>, vector<16x1xf32>
    %22 = vector.shape_cast %21 : vector<16x1xf32> to vector<16x1xf32>
    %23 = vector.broadcast %22 : vector<16x1xf32> to vector<16x512xf32>
    %c0_22 = arith.constant 0 : index
    %c0_23 = arith.constant 0 : index
    %24 = vector.load %arg11[%c0_22, %c0_23] : memref<32x1xf32, #tpu.memory_space<vmem>>, vector<32x1xf32>
    %25 = vector.shape_cast %24 : vector<32x1xf32> to vector<32x1xf32>
    %26 = vector.broadcast %25 : vector<32x1xf32> to vector<32x512xf32>
    %c0_24 = arith.constant 0 : index
    %c0_25 = arith.constant 0 : index
    %27 = vector.load %arg12[%c0_24, %c0_25] : memref<32x1xf32, #tpu.memory_space<vmem>>, vector<32x1xf32>
    %28 = vector.shape_cast %27 : vector<32x1xf32> to vector<32x1xf32>
    %29 = vector.broadcast %28 : vector<32x1xf32> to vector<32x512xf32>
    %c0_26 = arith.constant 0 : index
    %c0_27 = arith.constant 0 : index
    %30 = vector.load %arg3[%c0_26, %c0_27] : memref<16x32xf32, #tpu.memory_space<vmem>>, vector<16x32xf32>
    %31 = arith.truncf %30 : vector<16x32xf32> to vector<16x32xbf16>
    %32 = arith.truncf %8 : vector<32x512xf32> to vector<32x512xbf16>
    %cst = arith.constant dense<0.000000e+00> : vector<16x512xf32>
    %33 = tpu.matmul %31, %32, %cst {dimension_numbers = #tpu.dot_dimension_numbers<[1], [0], [0], [1], [0, 0, 1, 1], [], []>} : vector<16x32xbf16>, vector<32x512xbf16>, vector<16x512xf32> -> vector<16x512xf32>
    %34 = arith.addf %33, %11 : vector<16x512xf32>
    %cst_28 = arith.constant 5.000000e-01 : f32
    %35 = vector.broadcast %cst_28 : f32 to vector<16x512xf32>
    %36 = arith.mulf %35, %34 : vector<16x512xf32>
    %cst_29 = arith.constant 4.471500e-02 : f32
    %37 = vector.broadcast %cst_29 : f32 to vector<16x512xf32>
    %38 = arith.mulf %37, %34 : vector<16x512xf32>
    %39 = arith.mulf %38, %34 : vector<16x512xf32>
    %40 = arith.mulf %39, %34 : vector<16x512xf32>
    %41 = arith.addf %34, %40 : vector<16x512xf32>
    %cst_30 = arith.constant 0.797884583 : f32
    %42 = vector.broadcast %cst_30 : f32 to vector<16x512xf32>
    %43 = arith.mulf %42, %41 : vector<16x512xf32>
    %44 = math.tanh %43 : vector<16x512xf32>
    %cst_31 = arith.constant 1.000000e+00 : f32
    %45 = vector.broadcast %cst_31 : f32 to vector<16x512xf32>
    %46 = arith.addf %45, %44 : vector<16x512xf32>
    %47 = arith.mulf %36, %46 : vector<16x512xf32>
    %c0_32 = arith.constant 0 : index
    %c0_33 = arith.constant 0 : index
    %48 = vector.load %arg5[%c0_32, %c0_33] : memref<48x16xf32, #tpu.memory_space<vmem>>, vector<48x16xf32>
    %49 = arith.truncf %48 : vector<48x16xf32> to vector<48x16xbf16>
    %50 = arith.truncf %47 : vector<16x512xf32> to vector<16x512xbf16>
    %cst_34 = arith.constant dense<0.000000e+00> : vector<48x512xf32>
    %51 = tpu.matmul %49, %50, %cst_34 {dimension_numbers = #tpu.dot_dimension_numbers<[1], [0], [0], [1], [0, 0, 1, 1], [], []>} : vector<48x16xbf16>, vector<16x512xbf16>, vector<48x512xf32> -> vector<48x512xf32>
    %52 = arith.addf %51, %14 : vector<48x512xf32>
    %53 = vector.extract_strided_slice %52 {offsets = [0, 0], sizes = [16, 512], strides = [1, 1]} : vector<48x512xf32> to vector<16x512xf32>
    %cst_35 = arith.constant 2.500000e-01 : f32
    %54 = vector.broadcast %cst_35 : f32 to vector<16x512xf32>
    %55 = arith.mulf %53, %54 : vector<16x512xf32>
    %56 = vector.extract_strided_slice %52 {offsets = [16, 0], sizes = [16, 512], strides = [1, 1]} : vector<48x512xf32> to vector<16x512xf32>
    %57 = vector.extract_strided_slice %52 {offsets = [32, 0], sizes = [16, 512], strides = [1, 1]} : vector<48x512xf32> to vector<16x512xf32>
    %58 = vector.extract_strided_slice %55 {offsets = [0, 0], sizes = [16, 128], strides = [1, 1]} : vector<16x512xf32> to vector<16x128xf32>
    %59 = vector.extract_strided_slice %56 {offsets = [0, 0], sizes = [16, 128], strides = [1, 1]} : vector<16x512xf32> to vector<16x128xf32>
    %60 = arith.mulf %58, %59 : vector<16x128xf32>
    %cst_36 = arith.constant dense<0.000000e+00> : vector<128xf32>
    %61 = vector.multi_reduction <add>, %60, %cst_36 [0] : vector<16x128xf32> to vector<128xf32>
    %62 = vector.shape_cast %61 : vector<128xf32> to vector<1x128xf32>
    %63 = vector.extract_strided_slice %55 {offsets = [0, 0], sizes = [16, 128], strides = [1, 1]} : vector<16x512xf32> to vector<16x128xf32>
    %64 = vector.extract_strided_slice %56 {offsets = [0, 128], sizes = [16, 128], strides = [1, 1]} : vector<16x512xf32> to vector<16x128xf32>
    %65 = arith.mulf %63, %64 : vector<16x128xf32>
    %cst_37 = arith.constant dense<0.000000e+00> : vector<128xf32>
    %66 = vector.multi_reduction <add>, %65, %cst_37 [0] : vector<16x128xf32> to vector<128xf32>
    %67 = vector.shape_cast %66 : vector<128xf32> to vector<1x128xf32>
    %68 = vector.extract_strided_slice %55 {offsets = [0, 0], sizes = [16, 128], strides = [1, 1]} : vector<16x512xf32> to vector<16x128xf32>
    %69 = vector.extract_strided_slice %56 {offsets = [0, 256], sizes = [16, 128], strides = [1, 1]} : vector<16x512xf32> to vector<16x128xf32>
    %70 = arith.mulf %68, %69 : vector<16x128xf32>
    %cst_38 = arith.constant dense<0.000000e+00> : vector<128xf32>
    %71 = vector.multi_reduction <add>, %70, %cst_38 [0] : vector<16x128xf32> to vector<128xf32>
    %72 = vector.shape_cast %71 : vector<128xf32> to vector<1x128xf32>
    %73 = vector.extract_strided_slice %55 {offsets = [0, 0], sizes = [16, 128], strides = [1, 1]} : vector<16x512xf32> to vector<16x128xf32>
    %74 = vector.extract_strided_slice %56 {offsets = [0, 384], sizes = [16, 128], strides = [1, 1]} : vector<16x512xf32> to vector<16x128xf32>
    %75 = arith.mulf %73, %74 : vector<16x128xf32>
    %cst_39 = arith.constant dense<0.000000e+00> : vector<128xf32>
    %76 = vector.multi_reduction <add>, %75, %cst_39 [0] : vector<16x128xf32> to vector<128xf32>
    %77 = vector.shape_cast %76 : vector<128xf32> to vector<1x128xf32>
    %78 = arith.maximumf %62, %67 : vector<1x128xf32>
    %79 = arith.maximumf %78, %72 : vector<1x128xf32>
    %80 = arith.maximumf %79, %77 : vector<1x128xf32>
    %81 = arith.subf %62, %80 : vector<1x128xf32>
    %82 = math.exp %81 : vector<1x128xf32>
    %83 = arith.subf %67, %80 : vector<1x128xf32>
    %84 = math.exp %83 : vector<1x128xf32>
    %85 = arith.subf %72, %80 : vector<1x128xf32>
    %86 = math.exp %85 : vector<1x128xf32>
    %87 = arith.subf %77, %80 : vector<1x128xf32>
    %88 = math.exp %87 : vector<1x128xf32>
    %89 = arith.addf %82, %84 : vector<1x128xf32>
    %90 = arith.addf %89, %86 : vector<1x128xf32>
    %91 = arith.addf %90, %88 : vector<1x128xf32>
    %92 = tpu.reciprocal %91 {approx = true} : vector<1x128xf32> -> vector<1x128xf32>
    %93 = arith.mulf %91, %92 : vector<1x128xf32>
    %cst_40 = arith.constant 2.000000e+00 : f32
    %94 = vector.broadcast %cst_40 : f32 to vector<1x128xf32>
    %95 = arith.subf %94, %93 : vector<1x128xf32>
    %96 = arith.mulf %92, %95 : vector<1x128xf32>
    %97 = arith.mulf %82, %96 : vector<1x128xf32>
    %98 = vector.extract_strided_slice %57 {offsets = [0, 0], sizes = [16, 128], strides = [1, 1]} : vector<16x512xf32> to vector<16x128xf32>
    %99 = vector.broadcast %97 : vector<1x128xf32> to vector<16x128xf32>
    %100 = arith.mulf %99, %98 : vector<16x128xf32>
    %101 = arith.mulf %84, %96 : vector<1x128xf32>
    %102 = vector.extract_strided_slice %57 {offsets = [0, 128], sizes = [16, 128], strides = [1, 1]} : vector<16x512xf32> to vector<16x128xf32>
    %103 = vector.broadcast %101 : vector<1x128xf32> to vector<16x128xf32>
    %104 = arith.mulf %103, %102 : vector<16x128xf32>
    %105 = arith.addf %100, %104 : vector<16x128xf32>
    %106 = arith.mulf %86, %96 : vector<1x128xf32>
    %107 = vector.extract_strided_slice %57 {offsets = [0, 256], sizes = [16, 128], strides = [1, 1]} : vector<16x512xf32> to vector<16x128xf32>
    %108 = vector.broadcast %106 : vector<1x128xf32> to vector<16x128xf32>
    %109 = arith.mulf %108, %107 : vector<16x128xf32>
    %110 = arith.addf %105, %109 : vector<16x128xf32>
    %111 = arith.mulf %88, %96 : vector<1x128xf32>
    %112 = vector.extract_strided_slice %57 {offsets = [0, 384], sizes = [16, 128], strides = [1, 1]} : vector<16x512xf32> to vector<16x128xf32>
    %113 = vector.broadcast %111 : vector<1x128xf32> to vector<16x128xf32>
    %114 = arith.mulf %113, %112 : vector<16x128xf32>
    %115 = arith.addf %110, %114 : vector<16x128xf32>
    %116 = vector.extract_strided_slice %55 {offsets = [0, 128], sizes = [16, 128], strides = [1, 1]} : vector<16x512xf32> to vector<16x128xf32>
    %117 = vector.extract_strided_slice %56 {offsets = [0, 0], sizes = [16, 128], strides = [1, 1]} : vector<16x512xf32> to vector<16x128xf32>
    %118 = arith.mulf %116, %117 : vector<16x128xf32>
    %cst_41 = arith.constant dense<0.000000e+00> : vector<128xf32>
    %119 = vector.multi_reduction <add>, %118, %cst_41 [0] : vector<16x128xf32> to vector<128xf32>
    %120 = vector.shape_cast %119 : vector<128xf32> to vector<1x128xf32>
    %121 = vector.extract_strided_slice %55 {offsets = [0, 128], sizes = [16, 128], strides = [1, 1]} : vector<16x512xf32> to vector<16x128xf32>
    %122 = vector.extract_strided_slice %56 {offsets = [0, 128], sizes = [16, 128], strides = [1, 1]} : vector<16x512xf32> to vector<16x128xf32>
    %123 = arith.mulf %121, %122 : vector<16x128xf32>
    %cst_42 = arith.constant dense<0.000000e+00> : vector<128xf32>
    %124 = vector.multi_reduction <add>, %123, %cst_42 [0] : vector<16x128xf32> to vector<128xf32>
    %125 = vector.shape_cast %124 : vector<128xf32> to vector<1x128xf32>
    %126 = vector.extract_strided_slice %55 {offsets = [0, 128], sizes = [16, 128], strides = [1, 1]} : vector<16x512xf32> to vector<16x128xf32>
    %127 = vector.extract_strided_slice %56 {offsets = [0, 256], sizes = [16, 128], strides = [1, 1]} : vector<16x512xf32> to vector<16x128xf32>
    %128 = arith.mulf %126, %127 : vector<16x128xf32>
    %cst_43 = arith.constant dense<0.000000e+00> : vector<128xf32>
    %129 = vector.multi_reduction <add>, %128, %cst_43 [0] : vector<16x128xf32> to vector<128xf32>
    %130 = vector.shape_cast %129 : vector<128xf32> to vector<1x128xf32>
    %131 = vector.extract_strided_slice %55 {offsets = [0, 128], sizes = [16, 128], strides = [1, 1]} : vector<16x512xf32> to vector<16x128xf32>
    %132 = vector.extract_strided_slice %56 {offsets = [0, 384], sizes = [16, 128], strides = [1, 1]} : vector<16x512xf32> to vector<16x128xf32>
    %133 = arith.mulf %131, %132 : vector<16x128xf32>
    %cst_44 = arith.constant dense<0.000000e+00> : vector<128xf32>
    %134 = vector.multi_reduction <add>, %133, %cst_44 [0] : vector<16x128xf32> to vector<128xf32>
    %135 = vector.shape_cast %134 : vector<128xf32> to vector<1x128xf32>
    %136 = arith.maximumf %120, %125 : vector<1x128xf32>
    %137 = arith.maximumf %136, %130 : vector<1x128xf32>
    %138 = arith.maximumf %137, %135 : vector<1x128xf32>
    %139 = arith.subf %120, %138 : vector<1x128xf32>
    %140 = math.exp %139 : vector<1x128xf32>
    %141 = arith.subf %125, %138 : vector<1x128xf32>
    %142 = math.exp %141 : vector<1x128xf32>
    %143 = arith.subf %130, %138 : vector<1x128xf32>
    %144 = math.exp %143 : vector<1x128xf32>
    %145 = arith.subf %135, %138 : vector<1x128xf32>
    %146 = math.exp %145 : vector<1x128xf32>
    %147 = arith.addf %140, %142 : vector<1x128xf32>
    %148 = arith.addf %147, %144 : vector<1x128xf32>
    %149 = arith.addf %148, %146 : vector<1x128xf32>
    %150 = tpu.reciprocal %149 {approx = true} : vector<1x128xf32> -> vector<1x128xf32>
    %151 = arith.mulf %149, %150 : vector<1x128xf32>
    %cst_45 = arith.constant 2.000000e+00 : f32
    %152 = vector.broadcast %cst_45 : f32 to vector<1x128xf32>
    %153 = arith.subf %152, %151 : vector<1x128xf32>
    %154 = arith.mulf %150, %153 : vector<1x128xf32>
    %155 = arith.mulf %140, %154 : vector<1x128xf32>
    %156 = vector.extract_strided_slice %57 {offsets = [0, 0], sizes = [16, 128], strides = [1, 1]} : vector<16x512xf32> to vector<16x128xf32>
    %157 = vector.broadcast %155 : vector<1x128xf32> to vector<16x128xf32>
    %158 = arith.mulf %157, %156 : vector<16x128xf32>
    %159 = arith.mulf %142, %154 : vector<1x128xf32>
    %160 = vector.extract_strided_slice %57 {offsets = [0, 128], sizes = [16, 128], strides = [1, 1]} : vector<16x512xf32> to vector<16x128xf32>
    %161 = vector.broadcast %159 : vector<1x128xf32> to vector<16x128xf32>
    %162 = arith.mulf %161, %160 : vector<16x128xf32>
    %163 = arith.addf %158, %162 : vector<16x128xf32>
    %164 = arith.mulf %144, %154 : vector<1x128xf32>
    %165 = vector.extract_strided_slice %57 {offsets = [0, 256], sizes = [16, 128], strides = [1, 1]} : vector<16x512xf32> to vector<16x128xf32>
    %166 = vector.broadcast %164 : vector<1x128xf32> to vector<16x128xf32>
    %167 = arith.mulf %166, %165 : vector<16x128xf32>
    %168 = arith.addf %163, %167 : vector<16x128xf32>
    %169 = arith.mulf %146, %154 : vector<1x128xf32>
    %170 = vector.extract_strided_slice %57 {offsets = [0, 384], sizes = [16, 128], strides = [1, 1]} : vector<16x512xf32> to vector<16x128xf32>
    %171 = vector.broadcast %169 : vector<1x128xf32> to vector<16x128xf32>
    %172 = arith.mulf %171, %170 : vector<16x128xf32>
    %173 = arith.addf %168, %172 : vector<16x128xf32>
    %174 = vector.extract_strided_slice %55 {offsets = [0, 256], sizes = [16, 128], strides = [1, 1]} : vector<16x512xf32> to vector<16x128xf32>
    %175 = vector.extract_strided_slice %56 {offsets = [0, 0], sizes = [16, 128], strides = [1, 1]} : vector<16x512xf32> to vector<16x128xf32>
    %176 = arith.mulf %174, %175 : vector<16x128xf32>
    %cst_46 = arith.constant dense<0.000000e+00> : vector<128xf32>
    %177 = vector.multi_reduction <add>, %176, %cst_46 [0] : vector<16x128xf32> to vector<128xf32>
    %178 = vector.shape_cast %177 : vector<128xf32> to vector<1x128xf32>
    %179 = vector.extract_strided_slice %55 {offsets = [0, 256], sizes = [16, 128], strides = [1, 1]} : vector<16x512xf32> to vector<16x128xf32>
    %180 = vector.extract_strided_slice %56 {offsets = [0, 128], sizes = [16, 128], strides = [1, 1]} : vector<16x512xf32> to vector<16x128xf32>
    %181 = arith.mulf %179, %180 : vector<16x128xf32>
    %cst_47 = arith.constant dense<0.000000e+00> : vector<128xf32>
    %182 = vector.multi_reduction <add>, %181, %cst_47 [0] : vector<16x128xf32> to vector<128xf32>
    %183 = vector.shape_cast %182 : vector<128xf32> to vector<1x128xf32>
    %184 = vector.extract_strided_slice %55 {offsets = [0, 256], sizes = [16, 128], strides = [1, 1]} : vector<16x512xf32> to vector<16x128xf32>
    %185 = vector.extract_strided_slice %56 {offsets = [0, 256], sizes = [16, 128], strides = [1, 1]} : vector<16x512xf32> to vector<16x128xf32>
    %186 = arith.mulf %184, %185 : vector<16x128xf32>
    %cst_48 = arith.constant dense<0.000000e+00> : vector<128xf32>
    %187 = vector.multi_reduction <add>, %186, %cst_48 [0] : vector<16x128xf32> to vector<128xf32>
    %188 = vector.shape_cast %187 : vector<128xf32> to vector<1x128xf32>
    %189 = vector.extract_strided_slice %55 {offsets = [0, 256], sizes = [16, 128], strides = [1, 1]} : vector<16x512xf32> to vector<16x128xf32>
    %190 = vector.extract_strided_slice %56 {offsets = [0, 384], sizes = [16, 128], strides = [1, 1]} : vector<16x512xf32> to vector<16x128xf32>
    %191 = arith.mulf %189, %190 : vector<16x128xf32>
    %cst_49 = arith.constant dense<0.000000e+00> : vector<128xf32>
    %192 = vector.multi_reduction <add>, %191, %cst_49 [0] : vector<16x128xf32> to vector<128xf32>
    %193 = vector.shape_cast %192 : vector<128xf32> to vector<1x128xf32>
    %194 = arith.maximumf %178, %183 : vector<1x128xf32>
    %195 = arith.maximumf %194, %188 : vector<1x128xf32>
    %196 = arith.maximumf %195, %193 : vector<1x128xf32>
    %197 = arith.subf %178, %196 : vector<1x128xf32>
    %198 = math.exp %197 : vector<1x128xf32>
    %199 = arith.subf %183, %196 : vector<1x128xf32>
    %200 = math.exp %199 : vector<1x128xf32>
    %201 = arith.subf %188, %196 : vector<1x128xf32>
    %202 = math.exp %201 : vector<1x128xf32>
    %203 = arith.subf %193, %196 : vector<1x128xf32>
    %204 = math.exp %203 : vector<1x128xf32>
    %205 = arith.addf %198, %200 : vector<1x128xf32>
    %206 = arith.addf %205, %202 : vector<1x128xf32>
    %207 = arith.addf %206, %204 : vector<1x128xf32>
    %208 = tpu.reciprocal %207 {approx = true} : vector<1x128xf32> -> vector<1x128xf32>
    %209 = arith.mulf %207, %208 : vector<1x128xf32>
    %cst_50 = arith.constant 2.000000e+00 : f32
    %210 = vector.broadcast %cst_50 : f32 to vector<1x128xf32>
    %211 = arith.subf %210, %209 : vector<1x128xf32>
    %212 = arith.mulf %208, %211 : vector<1x128xf32>
    %213 = arith.mulf %198, %212 : vector<1x128xf32>
    %214 = vector.extract_strided_slice %57 {offsets = [0, 0], sizes = [16, 128], strides = [1, 1]} : vector<16x512xf32> to vector<16x128xf32>
    %215 = vector.broadcast %213 : vector<1x128xf32> to vector<16x128xf32>
    %216 = arith.mulf %215, %214 : vector<16x128xf32>
    %217 = arith.mulf %200, %212 : vector<1x128xf32>
    %218 = vector.extract_strided_slice %57 {offsets = [0, 128], sizes = [16, 128], strides = [1, 1]} : vector<16x512xf32> to vector<16x128xf32>
    %219 = vector.broadcast %217 : vector<1x128xf32> to vector<16x128xf32>
    %220 = arith.mulf %219, %218 : vector<16x128xf32>
    %221 = arith.addf %216, %220 : vector<16x128xf32>
    %222 = arith.mulf %202, %212 : vector<1x128xf32>
    %223 = vector.extract_strided_slice %57 {offsets = [0, 256], sizes = [16, 128], strides = [1, 1]} : vector<16x512xf32> to vector<16x128xf32>
    %224 = vector.broadcast %222 : vector<1x128xf32> to vector<16x128xf32>
    %225 = arith.mulf %224, %223 : vector<16x128xf32>
    %226 = arith.addf %221, %225 : vector<16x128xf32>
    %227 = arith.mulf %204, %212 : vector<1x128xf32>
    %228 = vector.extract_strided_slice %57 {offsets = [0, 384], sizes = [16, 128], strides = [1, 1]} : vector<16x512xf32> to vector<16x128xf32>
    %229 = vector.broadcast %227 : vector<1x128xf32> to vector<16x128xf32>
    %230 = arith.mulf %229, %228 : vector<16x128xf32>
    %231 = arith.addf %226, %230 : vector<16x128xf32>
    %232 = vector.extract_strided_slice %55 {offsets = [0, 384], sizes = [16, 128], strides = [1, 1]} : vector<16x512xf32> to vector<16x128xf32>
    %233 = vector.extract_strided_slice %56 {offsets = [0, 0], sizes = [16, 128], strides = [1, 1]} : vector<16x512xf32> to vector<16x128xf32>
    %234 = arith.mulf %232, %233 : vector<16x128xf32>
    %cst_51 = arith.constant dense<0.000000e+00> : vector<128xf32>
    %235 = vector.multi_reduction <add>, %234, %cst_51 [0] : vector<16x128xf32> to vector<128xf32>
    %236 = vector.shape_cast %235 : vector<128xf32> to vector<1x128xf32>
    %237 = vector.extract_strided_slice %55 {offsets = [0, 384], sizes = [16, 128], strides = [1, 1]} : vector<16x512xf32> to vector<16x128xf32>
    %238 = vector.extract_strided_slice %56 {offsets = [0, 128], sizes = [16, 128], strides = [1, 1]} : vector<16x512xf32> to vector<16x128xf32>
    %239 = arith.mulf %237, %238 : vector<16x128xf32>
    %cst_52 = arith.constant dense<0.000000e+00> : vector<128xf32>
    %240 = vector.multi_reduction <add>, %239, %cst_52 [0] : vector<16x128xf32> to vector<128xf32>
    %241 = vector.shape_cast %240 : vector<128xf32> to vector<1x128xf32>
    %242 = vector.extract_strided_slice %55 {offsets = [0, 384], sizes = [16, 128], strides = [1, 1]} : vector<16x512xf32> to vector<16x128xf32>
    %243 = vector.extract_strided_slice %56 {offsets = [0, 256], sizes = [16, 128], strides = [1, 1]} : vector<16x512xf32> to vector<16x128xf32>
    %244 = arith.mulf %242, %243 : vector<16x128xf32>
    %cst_53 = arith.constant dense<0.000000e+00> : vector<128xf32>
    %245 = vector.multi_reduction <add>, %244, %cst_53 [0] : vector<16x128xf32> to vector<128xf32>
    %246 = vector.shape_cast %245 : vector<128xf32> to vector<1x128xf32>
    %247 = vector.extract_strided_slice %55 {offsets = [0, 384], sizes = [16, 128], strides = [1, 1]} : vector<16x512xf32> to vector<16x128xf32>
    %248 = vector.extract_strided_slice %56 {offsets = [0, 384], sizes = [16, 128], strides = [1, 1]} : vector<16x512xf32> to vector<16x128xf32>
    %249 = arith.mulf %247, %248 : vector<16x128xf32>
    %cst_54 = arith.constant dense<0.000000e+00> : vector<128xf32>
    %250 = vector.multi_reduction <add>, %249, %cst_54 [0] : vector<16x128xf32> to vector<128xf32>
    %251 = vector.shape_cast %250 : vector<128xf32> to vector<1x128xf32>
    %252 = arith.maximumf %236, %241 : vector<1x128xf32>
    %253 = arith.maximumf %252, %246 : vector<1x128xf32>
    %254 = arith.maximumf %253, %251 : vector<1x128xf32>
    %255 = arith.subf %236, %254 : vector<1x128xf32>
    %256 = math.exp %255 : vector<1x128xf32>
    %257 = arith.subf %241, %254 : vector<1x128xf32>
    %258 = math.exp %257 : vector<1x128xf32>
    %259 = arith.subf %246, %254 : vector<1x128xf32>
    %260 = math.exp %259 : vector<1x128xf32>
    %261 = arith.subf %251, %254 : vector<1x128xf32>
    %262 = math.exp %261 : vector<1x128xf32>
    %263 = arith.addf %256, %258 : vector<1x128xf32>
    %264 = arith.addf %263, %260 : vector<1x128xf32>
    %265 = arith.addf %264, %262 : vector<1x128xf32>
    %266 = tpu.reciprocal %265 {approx = true} : vector<1x128xf32> -> vector<1x128xf32>
    %267 = arith.mulf %265, %266 : vector<1x128xf32>
    %cst_55 = arith.constant 2.000000e+00 : f32
    %268 = vector.broadcast %cst_55 : f32 to vector<1x128xf32>
    %269 = arith.subf %268, %267 : vector<1x128xf32>
    %270 = arith.mulf %266, %269 : vector<1x128xf32>
    %271 = arith.mulf %256, %270 : vector<1x128xf32>
    %272 = vector.extract_strided_slice %57 {offsets = [0, 0], sizes = [16, 128], strides = [1, 1]} : vector<16x512xf32> to vector<16x128xf32>
    %273 = vector.broadcast %271 : vector<1x128xf32> to vector<16x128xf32>
    %274 = arith.mulf %273, %272 : vector<16x128xf32>
    %275 = arith.mulf %258, %270 : vector<1x128xf32>
    %276 = vector.extract_strided_slice %57 {offsets = [0, 128], sizes = [16, 128], strides = [1, 1]} : vector<16x512xf32> to vector<16x128xf32>
    %277 = vector.broadcast %275 : vector<1x128xf32> to vector<16x128xf32>
    %278 = arith.mulf %277, %276 : vector<16x128xf32>
    %279 = arith.addf %274, %278 : vector<16x128xf32>
    %280 = arith.mulf %260, %270 : vector<1x128xf32>
    %281 = vector.extract_strided_slice %57 {offsets = [0, 256], sizes = [16, 128], strides = [1, 1]} : vector<16x512xf32> to vector<16x128xf32>
    %282 = vector.broadcast %280 : vector<1x128xf32> to vector<16x128xf32>
    %283 = arith.mulf %282, %281 : vector<16x128xf32>
    %284 = arith.addf %279, %283 : vector<16x128xf32>
    %285 = arith.mulf %262, %270 : vector<1x128xf32>
    %286 = vector.extract_strided_slice %57 {offsets = [0, 384], sizes = [16, 128], strides = [1, 1]} : vector<16x512xf32> to vector<16x128xf32>
    %287 = vector.broadcast %285 : vector<1x128xf32> to vector<16x128xf32>
    %288 = arith.mulf %287, %286 : vector<16x128xf32>
    %289 = arith.addf %284, %288 : vector<16x128xf32>
    %290 = tpu.concatenate %97, %101, %106, %111, %155, %159, %164, %169, %213, %217, %222, %227, %271, %275, %280, %285 in 0 : vector<1x128xf32>, vector<1x128xf32>, vector<1x128xf32>, vector<1x128xf32>, vector<1x128xf32>, vector<1x128xf32>, vector<1x128xf32>, vector<1x128xf32>, vector<1x128xf32>, vector<1x128xf32>, vector<1x128xf32>, vector<1x128xf32>, vector<1x128xf32>, vector<1x128xf32>, vector<1x128xf32>, vector<1x128xf32> -> vector<16x128xf32>
    %c0_56 = arith.constant 0 : index
    %c0_57 = arith.constant 0 : index
    %c0_58 = arith.constant 0 : index
    %291 = vector.load %arg14[%c0_56, %c0_57, %c0_58] : memref<1x16x128xf32, #tpu.memory_space<vmem>>, vector<1x16x128xf32>
    %292 = vector.shape_cast %291 : vector<1x16x128xf32> to vector<16x128xf32>
    %293 = vector.shape_cast %290 : vector<16x128xf32> to vector<1x16x128xf32>
    tpu.vector_store %arg14[%c0_56, %c0_57, %c0_58], %293 {strides = array<i32>} : memref<1x16x128xf32, #tpu.memory_space<vmem>>, vector<1x16x128xf32>,
    %294 = tpu.concatenate %115, %173, %231, %289 in 1 : vector<16x128xf32>, vector<16x128xf32>, vector<16x128xf32>, vector<16x128xf32> -> vector<16x512xf32>
    %295 = arith.addf %294, %47 : vector<16x512xf32>
    %cst_59 = arith.constant dense<0.000000e+00> : vector<512xf32>
    %296 = vector.multi_reduction <add>, %295, %cst_59 [0] : vector<16x512xf32> to vector<512xf32>
    %297 = vector.shape_cast %296 : vector<512xf32> to vector<1x512xf32>
    %cst_60 = arith.constant 1.600000e+01 : f32
    %298 = vector.broadcast %cst_60 : f32 to vector<1x512xf32>
    %299 = arith.divf %297, %298 : vector<1x512xf32>
    %300 = vector.broadcast %299 : vector<1x512xf32> to vector<16x512xf32>
    %301 = arith.subf %295, %300 : vector<16x512xf32>
    %302 = arith.mulf %301, %301 : vector<16x512xf32>
    %cst_61 = arith.constant dense<0.000000e+00> : vector<512xf32>
    %303 = vector.multi_reduction <add>, %302, %cst_61 [0] : vector<16x512xf32> to vector<512xf32>
    %304 = vector.shape_cast %303 : vector<512xf32> to vector<1x512xf32>
    %cst_62 = arith.constant 1.600000e+01 : f32
    %305 = vector.broadcast %cst_62 : f32 to vector<1x512xf32>
    %306 = arith.divf %304, %305 : vector<1x512xf32>
    %cst_63 = arith.constant 9.99999974E-6 : f32
    %307 = vector.broadcast %cst_63 : f32 to vector<1x512xf32>
    %308 = arith.addf %306, %307 : vector<1x512xf32>
    %309 = math.rsqrt %308 : vector<1x512xf32>
    %310 = vector.broadcast %309 : vector<1x512xf32> to vector<16x512xf32>
    %311 = arith.mulf %301, %310 : vector<16x512xf32>
    %312 = arith.mulf %311, %20 : vector<16x512xf32>
    %313 = arith.addf %312, %23 : vector<16x512xf32>
    %c0_64 = arith.constant 0 : index
    %c0_65 = arith.constant 0 : index
    %314 = vector.load %arg7[%c0_64, %c0_65] : memref<32x16xf32, #tpu.memory_space<vmem>>, vector<32x16xf32>
    %315 = arith.truncf %314 : vector<32x16xf32> to vector<32x16xbf16>
    %316 = arith.truncf %313 : vector<16x512xf32> to vector<16x512xbf16>
    %cst_66 = arith.constant dense<0.000000e+00> : vector<32x512xf32>
    %317 = tpu.matmul %315, %316, %cst_66 {dimension_numbers = #tpu.dot_dimension_numbers<[1], [0], [0], [1], [0, 0, 1, 1], [], []>} : vector<32x16xbf16>, vector<16x512xbf16>, vector<32x512xf32> -> vector<32x512xf32>
    %318 = arith.addf %317, %17 : vector<32x512xf32>
    %cst_67 = arith.constant 5.000000e-01 : f32
    %319 = vector.broadcast %cst_67 : f32 to vector<32x512xf32>
    %320 = arith.mulf %319, %318 : vector<32x512xf32>
    %cst_68 = arith.constant 4.471500e-02 : f32
    %321 = vector.broadcast %cst_68 : f32 to vector<32x512xf32>
    %322 = arith.mulf %321, %318 : vector<32x512xf32>
    %323 = arith.mulf %322, %318 : vector<32x512xf32>
    %324 = arith.mulf %323, %318 : vector<32x512xf32>
    %325 = arith.addf %318, %324 : vector<32x512xf32>
    %cst_69 = arith.constant 0.797884583 : f32
    %326 = vector.broadcast %cst_69 : f32 to vector<32x512xf32>
    %327 = arith.mulf %326, %325 : vector<32x512xf32>
    %328 = math.tanh %327 : vector<32x512xf32>
    %cst_70 = arith.constant 1.000000e+00 : f32
    %329 = vector.broadcast %cst_70 : f32 to vector<32x512xf32>
    %330 = arith.addf %329, %328 : vector<32x512xf32>
    %331 = arith.mulf %320, %330 : vector<32x512xf32>
    %332 = arith.addf %331, %8 : vector<32x512xf32>
    %cst_71 = arith.constant dense<0.000000e+00> : vector<512xf32>
    %333 = vector.multi_reduction <add>, %332, %cst_71 [0] : vector<32x512xf32> to vector<512xf32>
    %334 = vector.shape_cast %333 : vector<512xf32> to vector<1x512xf32>
    %cst_72 = arith.constant 3.200000e+01 : f32
    %335 = vector.broadcast %cst_72 : f32 to vector<1x512xf32>
    %336 = arith.divf %334, %335 : vector<1x512xf32>
    %337 = vector.broadcast %336 : vector<1x512xf32> to vector<32x512xf32>
    %338 = arith.subf %332, %337 : vector<32x512xf32>
    %339 = arith.mulf %338, %338 : vector<32x512xf32>
    %cst_73 = arith.constant dense<0.000000e+00> : vector<512xf32>
    %340 = vector.multi_reduction <add>, %339, %cst_73 [0] : vector<32x512xf32> to vector<512xf32>
    %341 = vector.shape_cast %340 : vector<512xf32> to vector<1x512xf32>
    %cst_74 = arith.constant 3.200000e+01 : f32
    %342 = vector.broadcast %cst_74 : f32 to vector<1x512xf32>
    %343 = arith.divf %341, %342 : vector<1x512xf32>
    %cst_75 = arith.constant 9.99999974E-6 : f32
    %344 = vector.broadcast %cst_75 : f32 to vector<1x512xf32>
    %345 = arith.addf %343, %344 : vector<1x512xf32>
    %346 = math.rsqrt %345 : vector<1x512xf32>
    %347 = vector.broadcast %346 : vector<1x512xf32> to vector<32x512xf32>
    %348 = arith.mulf %338, %347 : vector<32x512xf32>
    %349 = arith.mulf %348, %26 : vector<32x512xf32>
    %350 = arith.addf %349, %29 : vector<32x512xf32>
    %351 = vector.extract_strided_slice %350 {offsets = [0, 0], sizes = [32, 128], strides = [1, 1]} : vector<32x512xf32> to vector<32x128xf32>
    %352 = vector.extract_strided_slice %350 {offsets = [0, 128], sizes = [32, 128], strides = [1, 1]} : vector<32x512xf32> to vector<32x128xf32>
    %353 = arith.addf %351, %352 : vector<32x128xf32>
    %354 = vector.extract_strided_slice %350 {offsets = [0, 256], sizes = [32, 128], strides = [1, 1]} : vector<32x512xf32> to vector<32x128xf32>
    %355 = arith.addf %353, %354 : vector<32x128xf32>
    %356 = vector.extract_strided_slice %350 {offsets = [0, 384], sizes = [32, 128], strides = [1, 1]} : vector<32x512xf32> to vector<32x128xf32>
    %357 = arith.addf %355, %356 : vector<32x128xf32>
    %cst_76 = arith.constant 2.500000e-01 : f32
    %358 = vector.broadcast %cst_76 : f32 to vector<32x128xf32>
    %359 = arith.mulf %357, %358 : vector<32x128xf32>
    %c0_77 = arith.constant 0 : index
    %c0_78 = arith.constant 0 : index
    %c0_79 = arith.constant 0 : index
    %360 = vector.load %arg13[%c0_77, %c0_78, %c0_79] : memref<1x32x128xf32, #tpu.memory_space<vmem>>, vector<1x32x128xf32>
    %361 = vector.shape_cast %360 : vector<1x32x128xf32> to vector<32x128xf32>
    %362 = vector.shape_cast %359 : vector<32x128xf32> to vector<1x32x128xf32>
    tpu.vector_store %arg13[%c0_77, %c0_78, %c0_79], %362 {strides = array<i32>} : memref<1x32x128xf32, #tpu.memory_space<vmem>>, vector<1x32x128xf32>,
    return
  }
  func.func @transform_0(%arg0: i32, %arg1: i32) -> (i32, i32, i32, i32) {
    %c0_i32 = arith.constant 0 : i32
    %c0_i32_0 = arith.constant 0 : i32
    %c0_i32_1 = arith.constant 0 : i32
    return %arg0, %c0_i32, %c0_i32_0, %arg1 : i32, i32, i32, i32
  }
  func.func @transform_1(%arg0: i32, %arg1: i32) -> (i32, i32) {
    %c0_i32 = arith.constant 0 : i32
    %c0_i32_0 = arith.constant 0 : i32
    %c0_i32_1 = arith.constant 0 : i32
    return %c0_i32, %c0_i32_0 : i32, i32
  }
  func.func @transform_2(%arg0: i32, %arg1: i32) -> (i32, i32) {
    %c0_i32 = arith.constant 0 : i32
    %c0_i32_0 = arith.constant 0 : i32
    %c0_i32_1 = arith.constant 0 : i32
    return %c0_i32, %c0_i32_0 : i32, i32
  }
  func.func @transform_3(%arg0: i32, %arg1: i32) -> (i32, i32) {
    %c0_i32 = arith.constant 0 : i32
    %c0_i32_0 = arith.constant 0 : i32
    %c0_i32_1 = arith.constant 0 : i32
    return %c0_i32, %c0_i32_0 : i32, i32
  }
  func.func @transform_4(%arg0: i32, %arg1: i32) -> (i32, i32) {
    %c0_i32 = arith.constant 0 : i32
    %c0_i32_0 = arith.constant 0 : i32
    %c0_i32_1 = arith.constant 0 : i32
    return %c0_i32, %c0_i32_0 : i32, i32
  }
  func.func @transform_5(%arg0: i32, %arg1: i32) -> (i32, i32) {
    %c0_i32 = arith.constant 0 : i32
    %c0_i32_0 = arith.constant 0 : i32
    %c0_i32_1 = arith.constant 0 : i32
    return %c0_i32, %c0_i32_0 : i32, i32
  }
  func.func @transform_6(%arg0: i32, %arg1: i32) -> (i32, i32) {
    %c0_i32 = arith.constant 0 : i32
    %c0_i32_0 = arith.constant 0 : i32
    %c0_i32_1 = arith.constant 0 : i32
    return %c0_i32, %c0_i32_0 : i32, i32
  }
  func.func @transform_7(%arg0: i32, %arg1: i32) -> (i32, i32) {
    %c0_i32 = arith.constant 0 : i32
    %c0_i32_0 = arith.constant 0 : i32
    %c0_i32_1 = arith.constant 0 : i32
    return %c0_i32, %c0_i32_0 : i32, i32
  }
  func.func @transform_8(%arg0: i32, %arg1: i32) -> (i32, i32) {
    %c0_i32 = arith.constant 0 : i32
    %c0_i32_0 = arith.constant 0 : i32
    %c0_i32_1 = arith.constant 0 : i32
    return %c0_i32, %c0_i32_0 : i32, i32
  }
  func.func @transform_9(%arg0: i32, %arg1: i32) -> (i32, i32) {
    %c0_i32 = arith.constant 0 : i32
    %c0_i32_0 = arith.constant 0 : i32
    %c0_i32_1 = arith.constant 0 : i32
    return %c0_i32, %c0_i32_0 : i32, i32
  }
  func.func @transform_10(%arg0: i32, %arg1: i32) -> (i32, i32) {
    %c0_i32 = arith.constant 0 : i32
    %c0_i32_0 = arith.constant 0 : i32
    %c0_i32_1 = arith.constant 0 : i32
    return %c0_i32, %c0_i32_0 : i32, i32
  }
  func.func @transform_11(%arg0: i32, %arg1: i32) -> (i32, i32, i32) {
    %c0_i32 = arith.constant 0 : i32
    %c0_i32_0 = arith.constant 0 : i32
    return %arg0, %c0_i32, %arg1 : i32, i32, i32
  }
  func.func @transform_12(%arg0: i32, %arg1: i32) -> (i32, i32, i32) {
    %c0_i32 = arith.constant 0 : i32
    %c0_i32_0 = arith.constant 0 : i32
    return %arg0, %c0_i32, %arg1 : i32, i32, i32
  }
}

</mosaic_0001>

<llo_original>
// kernel: tpu_custom_call.1
$region0: #{tpu_custom_call.1}
  #allocation0 [shape = 'u32[]', space=smem, size = 0x4, offset = 0x4, fixed_abs, tag = 'smem constant byte address 0x4 - core index']
  #allocation1 [shape = 'u32[144,128]{1,0:T(1,128)}', space=vmem, size = 0x12000, scoped, tag = 'internal scratch']
  %s0 = inlined_call_operand.hbm [shape: f32[2,4,32,256], index: 0, kind: input, shape index: {}]
  %s1 = inlined_call_operand.vmem [shape: f32[16,32], index: 1, kind: input, shape index: {}]
  %s2 = inlined_call_operand.vmem [shape: f32[16,1], index: 2, kind: input, shape index: {}]
  %s3 = inlined_call_operand.vmem [shape: f32[48,16], index: 3, kind: input, shape index: {}]
  %s4 = inlined_call_operand.vmem [shape: f32[48,1], index: 4, kind: input, shape index: {}]
  %s5 = inlined_call_operand.vmem [shape: f32[32,16], index: 5, kind: input, shape index: {}]
  %s6 = inlined_call_operand.vmem [shape: f32[32,1], index: 6, kind: input, shape index: {}]
  %s7 = inlined_call_operand.vmem [shape: f32[16,1], index: 7, kind: input, shape index: {}]
  %s8 = inlined_call_operand.vmem [shape: f32[16,1], index: 8, kind: input, shape index: {}]
  %s9 = inlined_call_operand.vmem [shape: f32[32,1], index: 9, kind: input, shape index: {}]
  %s10 = inlined_call_operand.vmem [shape: f32[32,1], index: 10, kind: input, shape index: {}]
  %s11 = inlined_call_operand.hbm [shape: f32[2,32,256], index: 11, kind: output, shape index: {0}]
  %s12 = inlined_call_operand.hbm [shape: f32[2,16,256], index: 12, kind: output, shape index: {1}]
  %13 = xla_tuple %s11, %s12
  %s14 = sld [smem:[#allocation0]]
  $region89: #{tpu_custom_call.1} parent=0
    _
  %s16 = ssub.s32 1, %s14
  %s17 = scalar_select 0, %s16, %s14
  $region1: #{tpu_custom_call.1} parent=0
    #allocation2 [shape = 'u8[131072]{0}', space=vmem, size = 0x20000, scoped, tag = 'input window, operand 0']
    #allocation3 [shape = 's32[2]{0}', space=sflag, size = 0x8, scoped, tag = 'scoped memory for tpu_custom_call.1']
    #allocation4 [shape = 's32[2]{0}', space=sflag, size = 0x8, scoped, tag = 'scoped memory for tpu_custom_call.1']
    #allocation5 [shape = 'u8[32768]{0}', space=vmem, size = 0x8000, scoped, tag = 'output window, operand 0']
    #allocation6 [shape = 'u8[16384]{0}', space=vmem, size = 0x4000, scoped, tag = 'output window, operand 1']
    #allocation7 [shape = 's32[2]{0}', space=sflag, size = 0x8, scoped, tag = 'scoped memory for tpu_custom_call.1']
    %18 = vsyncpa [#allocation3], 0
    %s19 = scalar_lea.sflag [#allocation3], 1
    %20 = vsyncpa %s19, 0
    %21 = vsyncpa [#allocation4], 0
    %s22 = scalar_lea.sflag [#allocation4], 1
    %23 = vsyncpa %s22, 0
    %24 = vsyncpa [#allocation7], 0
    %s25 = scalar_lea.sflag [#allocation7], 1
    %26 = vsyncpa %s25, 0
    loop: start=0, step=1, limit=6
    $region2: #{tpu_custom_call.1} parent=1 // loop_pre_header
      _
    $region3: #{tpu_custom_call.1} parent=1 // loop_header
      %s28 = sphi 0, %s32
      %p29 = scmp.ge.s32.totalorder %s28, 6
      %s35 = sphi 0, %s47
      %s36 = sphi 0, %s43
      %s37 = sphi 0, %s35
      %s38 = sphi 0, %s36
      %s39 = sphi 0, %s37
      %s40 = sphi 0, %s38
      %s52 = sphi 0, %s54
      %s55 = sphi 0, %s52
      %s56 = sphi 0, %s55
      %s72 = sphi 0, %s56
      %s76 = sphi 0, %s76
      %s78 = sphi 0, %s76
      %s79 = sphi 0, %s78
      %s93 = sphi 0, %s79
      %s97 = sphi 0, %s97
      %s99 = sphi 0, %s97
      %s100 = sphi 0, %s99
      %s114 = sphi 0, %s100
      %s118 = sphi 0, %s118
      %s120 = sphi 0, %s118
      %s121 = sphi 0, %s120
      %s135 = sphi 0, %s121
      %s139 = sphi 0, %s139
      %s141 = sphi 0, %s139
      %s142 = sphi 0, %s141
      %s156 = sphi 0, %s142
      %s160 = sphi 0, %s160
      %s162 = sphi 0, %s160
      %s163 = sphi 0, %s162
      %s177 = sphi 0, %s163
      %s181 = sphi 0, %s181
      %s183 = sphi 0, %s181
      %s184 = sphi 0, %s183
      %s198 = sphi 0, %s184
      %s202 = sphi 0, %s202
      %s204 = sphi 0, %s202
      %s205 = sphi 0, %s204
      %s219 = sphi 0, %s205
      %s223 = sphi 0, %s223
      %s225 = sphi 0, %s223
      %s226 = sphi 0, %s225
      %s240 = sphi 0, %s226
      %s244 = sphi 0, %s244
      %s246 = sphi 0, %s244
      %s247 = sphi 0, %s246
      %s261 = sphi 0, %s247
      %s265 = sphi 0, %s265
      %s267 = sphi 0, %s265
      %s268 = sphi 0, %s267
      %s282 = sphi 0, %s268
      %s290 = sphi 0, %s292
      %s293 = sphi 0, %s290
      %s294 = sphi 0, %s293
      %s310 = sphi 0, %s294
      %s318 = sphi 0, %s320
      %s321 = sphi 0, %s318
      %s322 = sphi 0, %s321
      %s338 = sphi 0, %s322
    $region4: #{tpu_custom_call.1} parent=1 // loop_header_branch
      %31 = sbr.rel (%p29) target = $region8
    $region5: #{tpu_custom_call.1} parent=1 // loop_body
      %s33 = ssub.s32 %s28, 1
      %s34 = ssub.s32 %s28, 2
      %s41 = sadd.s32 1, %s36
      %p42 = scmp.ge.s32.totalorder %s41, 2
      %s43 = scalar_select %p42, 0, %s41
      %s44 = sadd.s32 1, %s35
      %s45 = scalar_select %p42, %s44, %s35
      %p46 = scmp.ge.s32.totalorder %s45, 2
      %s47 = scalar_select %p46, 0, %s45
      %s48 = ssub.s32 %s35, %s47
      %s49 = ssub.s32 %s36, %s43
      %s50 = sor.u32 %s48, %s49
      %p51 = scmp.eq.s32.totalorder %s50, 0
      %s53 = sadd.s32 %s52, 1
      %s54 = scalar_select %p51, %s52, %s53
      %p57 = pneg %p51
      %p58 = scmp.eq.s32.totalorder %s28, 3
      %p59 = por %p57, %p58
      %p60 = scmp.ne.s32.totalorder %s52, %s55
      %p61 = scmp.eq.s32.totalorder %s28, 0
      %p62 = por %p60, %p61
      %p63 = scmp.ne.s32.totalorder %s52, %s55
      %p64 = scmp.eq.s32.totalorder %s33, 3
      %p65 = por %p63, %p64
      %p66 = scmp.ne.s32.totalorder %s55, %s56
      %p67 = scmp.eq.s32.totalorder %s33, 0
      %p68 = por %p66, %p67
      %p69 = scmp.ne.s32.totalorder %s55, %s56
      %p70 = scmp.eq.s32.totalorder %s34, 3
      %p71 = por %p69, %p70
      %p73 = scmp.ne.s32.totalorder %s56, %s72
      %p74 = scmp.eq.s32.totalorder %s34, 0
      %p75 = por %p73, %p74
      %s77 = sadd.s32 %s76, 1
      %p80 = scmp.eq.s32.totalorder %s28, 3
      %p81 = scmp.ne.s32.totalorder %s76, %s78
      %p82 = scmp.eq.s32.totalorder %s28, 0
      %p83 = por %p81, %p82
      %p84 = scmp.ne.s32.totalorder %s76, %s78
      %p85 = scmp.eq.s32.totalorder %s33, 3
      %p86 = por %p84, %p85
      %p87 = scmp.ne.s32.totalorder %s78, %s79
      %p88 = scmp.eq.s32.totalorder %s33, 0
      %p89 = por %p87, %p88
      %p90 = scmp.ne.s32.totalorder %s78, %s79
      %p91 = scmp.eq.s32.totalorder %s34, 3
      %p92 = por %p90, %p91
      %p94 = scmp.ne.s32.totalorder %s79, %s93
      %p95 = scmp.eq.s32.totalorder %s34, 0
      %p96 = por %p94, %p95
      %s98 = sadd.s32 %s97, 1
      %p101 = scmp.eq.s32.totalorder %s28, 3
      %p102 = scmp.ne.s32.totalorder %s97, %s99
      %p103 = scmp.eq.s32.totalorder %s28, 0
      %p104 = por %p102, %p103
      %p105 = scmp.ne.s32.totalorder %s97, %s99
      %p106 = scmp.eq.s32.totalorder %s33, 3
      %p107 = por %p105, %p106
      %p108 = scmp.ne.s32.totalorder %s99, %s100
      %p109 = scmp.eq.s32.totalorder %s33, 0
      %p110 = por %p108, %p109
      %p111 = scmp.ne.s32.totalorder %s99, %s100
      %p112 = scmp.eq.s32.totalorder %s34, 3
      %p113 = por %p111, %p112
      %p115 = scmp.ne.s32.totalorder %s100, %s114
      %p116 = scmp.eq.s32.totalorder %s34, 0
      %p117 = por %p115, %p116
      %s119 = sadd.s32 %s118, 1
      %p122 = scmp.eq.s32.totalorder %s28, 3
      %p123 = scmp.ne.s32.totalorder %s118, %s120
      %p124 = scmp.eq.s32.totalorder %s28, 0
      %p125 = por %p123, %p124
      %p126 = scmp.ne.s32.totalorder %s118, %s120
      %p127 = scmp.eq.s32.totalorder %s33, 3
      %p128 = por %p126, %p127
      %p129 = scmp.ne.s32.totalorder %s120, %s121
      %p130 = scmp.eq.s32.totalorder %s33, 0
      %p131 = por %p129, %p130
      %p132 = scmp.ne.s32.totalorder %s120, %s121
      %p133 = scmp.eq.s32.totalorder %s34, 3
      %p134 = por %p132, %p133
      %p136 = scmp.ne.s32.totalorder %s121, %s135
      %p137 = scmp.eq.s32.totalorder %s34, 0
      %p138 = por %p136, %p137
      %s140 = sadd.s32 %s139, 1
      %p143 = scmp.eq.s32.totalorder %s28, 3
      %p144 = scmp.ne.s32.totalorder %s139, %s141
      %p145 = scmp.eq.s32.totalorder %s28, 0
      %p146 = por %p144, %p145
      %p147 = scmp.ne.s32.totalorder %s139, %s141
      %p148 = scmp.eq.s32.totalorder %s33, 3
      %p149 = por %p147, %p148
      %p150 = scmp.ne.s32.totalorder %s141, %s142
      %p151 = scmp.eq.s32.totalorder %s33, 0
      %p152 = por %p150, %p151
      %p153 = scmp.ne.s32.totalorder %s141, %s142
      %p154 = scmp.eq.s32.totalorder %s34, 3
      %p155 = por %p153, %p154
      %p157 = scmp.ne.s32.totalorder %s142, %s156
      %p158 = scmp.eq.s32.totalorder %s34, 0
      %p159 = por %p157, %p158
      %s161 = sadd.s32 %s160, 1
      %p164 = scmp.eq.s32.totalorder %s28, 3
      %p165 = scmp.ne.s32.totalorder %s160, %s162
      %p166 = scmp.eq.s32.totalorder %s28, 0
      %p167 = por %p165, %p166
      %p168 = scmp.ne.s32.totalorder %s160, %s162
      %p169 = scmp.eq.s32.totalorder %s33, 3
      %p170 = por %p168, %p169
      %p171 = scmp.ne.s32.totalorder %s162, %s163
      %p172 = scmp.eq.s32.totalorder %s33, 0
      %p173 = por %p171, %p172
      %p174 = scmp.ne.s32.totalorder %s162, %s163
      %p175 = scmp.eq.s32.totalorder %s34, 3
      %p176 = por %p174, %p175
      %p178 = scmp.ne.s32.totalorder %s163, %s177
      %p179 = scmp.eq.s32.totalorder %s34, 0
      %p180 = por %p178, %p179
      %s182 = sadd.s32 %s181, 1
      %p185 = scmp.eq.s32.totalorder %s28, 3
      %p186 = scmp.ne.s32.totalorder %s181, %s183
      %p187 = scmp.eq.s32.totalorder %s28, 0
      %p188 = por %p186, %p187
      %p189 = scmp.ne.s32.totalorder %s181, %s183
      %p190 = scmp.eq.s32.totalorder %s33, 3
      %p191 = por %p189, %p190
      %p192 = scmp.ne.s32.totalorder %s183, %s184
      %p193 = scmp.eq.s32.totalorder %s33, 0
      %p194 = por %p192, %p193
      %p195 = scmp.ne.s32.totalorder %s183, %s184
      %p196 = scmp.eq.s32.totalorder %s34, 3
      %p197 = por %p195, %p196
      %p199 = scmp.ne.s32.totalorder %s184, %s198
      %p200 = scmp.eq.s32.totalorder %s34, 0
      %p201 = por %p199, %p200
      %s203 = sadd.s32 %s202, 1
      %p206 = scmp.eq.s32.totalorder %s28, 3
      %p207 = scmp.ne.s32.totalorder %s202, %s204
      %p208 = scmp.eq.s32.totalorder %s28, 0
      %p209 = por %p207, %p208
      %p210 = scmp.ne.s32.totalorder %s202, %s204
      %p211 = scmp.eq.s32.totalorder %s33, 3
      %p212 = por %p210, %p211
      %p213 = scmp.ne.s32.totalorder %s204, %s205
      %p214 = scmp.eq.s32.totalorder %s33, 0
      %p215 = por %p213, %p214
      %p216 = scmp.ne.s32.totalorder %s204, %s205
      %p217 = scmp.eq.s32.totalorder %s34, 3
      %p218 = por %p216, %p217
      %p220 = scmp.ne.s32.totalorder %s205, %s219
      %p221 = scmp.eq.s32.totalorder %s34, 0
      %p222 = por %p220, %p221
      %s224 = sadd.s32 %s223, 1
      %p227 = scmp.eq.s32.totalorder %s28, 3
      %p228 = scmp.ne.s32.totalorder %s223, %s225
      %p229 = scmp.eq.s32.totalorder %s28, 0
      %p230 = por %p228, %p229
      %p231 = scmp.ne.s32.totalorder %s223, %s225
      %p232 = scmp.eq.s32.totalorder %s33, 3
      %p233 = por %p231, %p232
      %p234 = scmp.ne.s32.totalorder %s225, %s226
      %p235 = scmp.eq.s32.totalorder %s33, 0
      %p236 = por %p234, %p235
      %p237 = scmp.ne.s32.totalorder %s225, %s226
      %p238 = scmp.eq.s32.totalorder %s34, 3
      %p239 = por %p237, %p238
      %p241 = scmp.ne.s32.totalorder %s226, %s240
      %p242 = scmp.eq.s32.totalorder %s34, 0
      %p243 = por %p241, %p242
      %s245 = sadd.s32 %s244, 1
      %p248 = scmp.eq.s32.totalorder %s28, 3
      %p249 = scmp.ne.s32.totalorder %s244, %s246
      %p250 = scmp.eq.s32.totalorder %s28, 0
      %p251 = por %p249, %p250
      %p252 = scmp.ne.s32.totalorder %s244, %s246
      %p253 = scmp.eq.s32.totalorder %s33, 3
      %p254 = por %p252, %p253
      %p255 = scmp.ne.s32.totalorder %s246, %s247
      %p256 = scmp.eq.s32.totalorder %s33, 0
      %p257 = por %p255, %p256
      %p258 = scmp.ne.s32.totalorder %s246, %s247
      %p259 = scmp.eq.s32.totalorder %s34, 3
      %p260 = por %p258, %p259
      %p262 = scmp.ne.s32.totalorder %s247, %s261
      %p263 = scmp.eq.s32.totalorder %s34, 0
      %p264 = por %p262, %p263
      %s266 = sadd.s32 %s265, 1
      %p269 = scmp.eq.s32.totalorder %s28, 3
      %p270 = scmp.ne.s32.totalorder %s265, %s267
      %p271 = scmp.eq.s32.totalorder %s28, 0
      %p272 = por %p270, %p271
      %p273 = scmp.ne.s32.totalorder %s265, %s267
      %p274 = scmp.eq.s32.totalorder %s33, 3
      %p275 = por %p273, %p274
      %p276 = scmp.ne.s32.totalorder %s267, %s268
      %p277 = scmp.eq.s32.totalorder %s33, 0
      %p278 = por %p276, %p277
      %p279 = scmp.ne.s32.totalorder %s267, %s268
      %p280 = scmp.eq.s32.totalorder %s34, 3
      %p281 = por %p279, %p280
      %p283 = scmp.ne.s32.totalorder %s268, %s282
      %p284 = scmp.eq.s32.totalorder %s34, 0
      %p285 = por %p283, %p284
      %s286 = ssub.s32 %s35, %s47
      %s287 = ssub.s32 %s36, %s43
      %s288 = sor.u32 %s286, %s287
      %p289 = scmp.eq.s32.totalorder %s288, 0
      %s291 = sadd.s32 %s290, 1
      %s292 = scalar_select %p289, %s290, %s291
      %p295 = pneg %p289
      %p296 = scmp.eq.s32.totalorder %s28, 3
      %p297 = por %p295, %p296
      %p298 = scmp.ne.s32.totalorder %s290, %s293
      %p299 = scmp.eq.s32.totalorder %s28, 0
      %p300 = por %p298, %p299
      %p301 = scmp.ne.s32.totalorder %s290, %s293
      %p302 = scmp.eq.s32.totalorder %s33, 3
      %p303 = por %p301, %p302
      %p304 = scmp.ne.s32.totalorder %s293, %s294
      %p305 = scmp.eq.s32.totalorder %s33, 0
      %p306 = por %p304, %p305
      %p307 = scmp.ne.s32.totalorder %s293, %s294
      %p308 = scmp.eq.s32.totalorder %s34, 3
      %p309 = por %p307, %p308
      %p311 = scmp.ne.s32.totalorder %s294, %s310
      %p312 = scmp.eq.s32.totalorder %s34, 0
      %p313 = por %p311, %p312
      %s314 = ssub.s32 %s35, %s47
      %s315 = ssub.s32 %s36, %s43
      %s316 = sor.u32 %s314, %s315
      %p317 = scmp.eq.s32.totalorder %s316, 0
      %s319 = sadd.s32 %s318, 1
      %s320 = scalar_select %p317, %s318, %s319
      %p323 = pneg %p317
      %p324 = scmp.eq.s32.totalorder %s28, 3
      %p325 = por %p323, %p324
      %p326 = scmp.ne.s32.totalorder %s318, %s321
      %p327 = scmp.eq.s32.totalorder %s28, 0
      %p328 = por %p326, %p327
      %p329 = scmp.ne.s32.totalorder %s318, %s321
      %p330 = scmp.eq.s32.totalorder %s33, 3
      %p331 = por %p329, %p330
      %p332 = scmp.ne.s32.totalorder %s321, %s322
      %p333 = scmp.eq.s32.totalorder %s33, 0
      %p334 = por %p332, %p333
      %p335 = scmp.ne.s32.totalorder %s321, %s322
      %p336 = scmp.eq.s32.totalorder %s34, 3
      %p337 = por %p335, %p336
      %p339 = scmp.ne.s32.totalorder %s322, %s338
      %p340 = scmp.eq.s32.totalorder %s34, 0
      %p341 = por %p339, %p340
      %p342 = scmp.le.s32.totalorder 1, %s28
      %p343 = scmp.lt.s32.totalorder %s28, 5
      %p344 = pnand %p342, %p343
      %p345 = pneg %p344
      // Predicated region
      $region9: #{tpu_custom_call.1} parent=5 // pred_check
        _
      $region10: #{tpu_custom_call.1} parent=5 // pred_check_branch
        %347 = sbr.rel (%p344) target = $region12
      $region11: #{tpu_custom_call.1} parent=5 // pred_region
        %s348 = ssub.s32 %s28, 1
        // Predicated region
        $region13: #{tpu_custom_call.1} parent=11 // pred_check
          %p349 = pneg %p89
        $region14: #{tpu_custom_call.1} parent=11 // pred_check_branch
          %351 = sbr.rel (%p349) target = $region16
        $region15: #{tpu_custom_call.1} parent=11 // pred_region
          _
        $region16: #{tpu_custom_call.1} parent=11 // pred_fallthru
          _
        // Predicated region
        $region17: #{tpu_custom_call.1} parent=11 // pred_check
          %p352 = pneg %p110
        $region18: #{tpu_custom_call.1} parent=11 // pred_check_branch
          %354 = sbr.rel (%p352) target = $region20
        $region19: #{tpu_custom_call.1} parent=11 // pred_region
          _
        $region20: #{tpu_custom_call.1} parent=11 // pred_fallthru
          _
        // Predicated region
        $region21: #{tpu_custom_call.1} parent=11 // pred_check
          %p355 = pneg %p131
        $region22: #{tpu_custom_call.1} parent=11 // pred_check_branch
          %357 = sbr.rel (%p355) target = $region24
        $region23: #{tpu_custom_call.1} parent=11 // pred_region
          _
        $region24: #{tpu_custom_call.1} parent=11 // pred_fallthru
          _
        // Predicated region
        $region25: #{tpu_custom_call.1} parent=11 // pred_check
          %p358 = pneg %p152
        $region26: #{tpu_custom_call.1} parent=11 // pred_check_branch
          %360 = sbr.rel (%p358) target = $region28
        $region27: #{tpu_custom_call.1} parent=11 // pred_region
          _
        $region28: #{tpu_custom_call.1} parent=11 // pred_fallthru
          _
        // Predicated region
        $region29: #{tpu_custom_call.1} parent=11 // pred_check
          %p361 = pneg %p173
        $region30: #{tpu_custom_call.1} parent=11 // pred_check_branch
          %363 = sbr.rel (%p361) target = $region32
        $region31: #{tpu_custom_call.1} parent=11 // pred_region
          _
        $region32: #{tpu_custom_call.1} parent=11 // pred_fallthru
          _
        // Predicated region
        $region33: #{tpu_custom_call.1} parent=11 // pred_check
          %p364 = pneg %p194
        $region34: #{tpu_custom_call.1} parent=11 // pred_check_branch
          %366 = sbr.rel (%p364) target = $region36
        $region35: #{tpu_custom_call.1} parent=11 // pred_region
          _
        $region36: #{tpu_custom_call.1} parent=11 // pred_fallthru
          _
        // Predicated region
        $region37: #{tpu_custom_call.1} parent=11 // pred_check
          %p367 = pneg %p215
        $region38: #{tpu_custom_call.1} parent=11 // pred_check_branch
          %369 = sbr.rel (%p367) target = $region40
        $region39: #{tpu_custom_call.1} parent=11 // pred_region
          _
        $region40: #{tpu_custom_call.1} parent=11 // pred_fallthru
          _
        // Predicated region
        $region41: #{tpu_custom_call.1} parent=11 // pred_check
          %p370 = pneg %p236
        $region42: #{tpu_custom_call.1} parent=11 // pred_check_branch
          %372 = sbr.rel (%p370) target = $region44
        $region43: #{tpu_custom_call.1} parent=11 // pred_region
          _
        $region44: #{tpu_custom_call.1} parent=11 // pred_fallthru
          _
        // Predicated region
        $region45: #{tpu_custom_call.1} parent=11 // pred_check
          %p373 = pneg %p257
        $region46: #{tpu_custom_call.1} parent=11 // pred_check_branch
          %375 = sbr.rel (%p373) target = $region48
        $region47: #{tpu_custom_call.1} parent=11 // pred_region
          _
        $region48: #{tpu_custom_call.1} parent=11 // pred_fallthru
          _
        // Predicated region
        $region49: #{tpu_custom_call.1} parent=11 // pred_check
          %p376 = pneg %p278
        $region50: #{tpu_custom_call.1} parent=11 // pred_check_branch
          %378 = sbr.rel (%p376) target = $region52
        $region51: #{tpu_custom_call.1} parent=11 // pred_region
          _
        $region52: #{tpu_custom_call.1} parent=11 // pred_fallthru
          _
      $region12: #{tpu_custom_call.1} parent=5 // pred_fallthru
        _
      %p379 = scmp.lt.s32.totalorder %s28, 4
      // Predicated region
      $region53: #{tpu_custom_call.1} parent=5 // pred_check
        %p380 = pneg %p379
      $region54: #{tpu_custom_call.1} parent=5 // pred_check_branch
        %382 = sbr.rel (%p380) target = $region56
      $region55: #{tpu_custom_call.1} parent=5 // pred_region
        // Predicated region
        $region57: #{tpu_custom_call.1} parent=55 // pred_check
          %p383 = pneg %p62
        $region58: #{tpu_custom_call.1} parent=55 // pred_check_branch
          %385 = sbr.rel (%p383) target = $region60
        $region59: #{tpu_custom_call.1} parent=55 // pred_region
          %s386 = sand.u32 %s52, 1
          %s387 = scalar_lea.sflag [#allocation3], %s386
          %s388 = sand.u32 %s52, 1
          %s389 = smul.addr %s388, 128
          %s390 = scalar_lea.vmem [#allocation2], %s389
          %s392 = ssub.s32 2048, 2048
          %393 = vsyncadd %s387, %s392
          %s394 = smul.addr %s35, 32
          %s395 = sadd.s32 %s36, %s394
          %s396 = smul.addr %s395, 128
          %s397 = scalar_lea.hbm %s0, %s396
          %s398 = sshll.u32 %s390, 4
          %s399 = int_to_ptr.vmem [resolvable:$true] %s398
          %404 = dma.hbm_to_vmem [thread:$0]  %s397, 2048, %s399, %s387, 256, 128, 8
        $region60: #{tpu_custom_call.1} parent=55 // pred_fallthru
          _
      $region56: #{tpu_custom_call.1} parent=5 // pred_fallthru
        _
      %p405 = scmp.le.s32.totalorder 1, %s28
      %p406 = scmp.lt.s32.totalorder %s28, 5
      %p407 = pnand %p405, %p406
      %p408 = pneg %p407
      // Predicated region
      $region61: #{tpu_custom_call.1} parent=5 // pred_check
        _
      $region62: #{tpu_custom_call.1} parent=5 // pred_check_branch
        %410 = sbr.rel (%p407) target = $region64
      $region63: #{tpu_custom_call.1} parent=5 // pred_region
        %s411 = ssub.s32 %s28, 1
        %s412 = sand.u32 %s55, 1
        %s413 = scalar_lea.sflag [#allocation3], %s412
        %s414 = sand.u32 %s55, 1
        %s415 = smul.addr %s414, 128
        %s416 = scalar_lea.vmem [#allocation2], %s415
        // Predicated region
        $region65: #{tpu_custom_call.1} parent=63 // pred_check
          %p417 = pneg %p68
        $region66: #{tpu_custom_call.1} parent=63 // pred_check_branch
          %419 = sbr.rel (%p417) target = $region68
        $region67: #{tpu_custom_call.1} parent=63 // pred_region
          %420 = dma.done %s413, 2048
        $region68: #{tpu_custom_call.1} parent=63 // pred_fallthru
          _
        %s421 = sand.u32 %s55, 1
        %s422 = scalar_lea.sflag [#allocation3], %s421
        %s423 = sand.u32 %s55, 1
        %s424 = smul.addr %s423, 128
        %s425 = scalar_lea.vmem [#allocation2], %s424
        %p426 = pneg %p68
        %p427 = pneg %p65
        %p428 = pneg %p89
        %p429 = pneg %p86
        %p430 = pneg %p110
        %p431 = pneg %p107
        %p432 = pneg %p131
        %p433 = pneg %p128
        %p434 = pneg %p152
        %p435 = pneg %p149
        %p436 = pneg %p173
        %p437 = pneg %p170
        %p438 = pneg %p194
        %p439 = pneg %p191
        %p440 = pneg %p215
        %p441 = pneg %p212
        %p442 = pneg %p236
        %p443 = pneg %p233
        %p444 = pneg %p257
        %p445 = pneg %p254
        %p446 = pneg %p278
        %p447 = pneg %p275
        %p448 = pneg %p306
        %p449 = pneg %p303
        %s450 = sand.u32 %s293, 1
        %s451 = scalar_lea.sflag [#allocation4], %s450
        %s452 = sand.u32 %s293, 1
        %s453 = smul.addr %s452, 32
        %s454 = scalar_lea.vmem [#allocation5], %s453
        %p455 = pneg %p334
        %p456 = pneg %p331
        %s457 = sand.u32 %s321, 1
        %s458 = scalar_lea.sflag [#allocation7], %s457
        %s459 = sand.u32 %s321, 1
        %s460 = smul.addr %s459, 16
        %s461 = scalar_lea.vmem [#allocation6], %s460
        %v463 = vld [vmem:[%s416] sm:$0xff]
        %v464 = vld [vmem:[%s416 + $0x8] sm:$0xff]
        %v465 = vld [vmem:[%s416 + $0x10] sm:$0xff]
        %v466 = vld [vmem:[%s416 + $0x18] sm:$0xff]
        %s467 = scalar_lea.vmem %s416, 32 [#allocation2]
        %v468 = vld [vmem:[%s467] sm:$0xff]
        %v469 = vld [vmem:[%s467 + $0x8] sm:$0xff]
        %v470 = vld [vmem:[%s467 + $0x10] sm:$0xff]
        %v471 = vld [vmem:[%s467 + $0x18] sm:$0xff]
        %s472 = scalar_lea.vmem %s416, 64 [#allocation2]
        %v473 = vld [vmem:[%s472] sm:$0xff]
        %v474 = vld [vmem:[%s472 + $0x8] sm:$0xff]
        %v475 = vld [vmem:[%s472 + $0x10] sm:$0xff]
        %v476 = vld [vmem:[%s472 + $0x18] sm:$0xff]
        %s477 = scalar_lea.vmem %s416, 96 [#allocation2]
        %v478 = vld [vmem:[%s477] sm:$0xff]
        %v479 = vld [vmem:[%s477 + $0x8] sm:$0xff]
        %v480 = vld [vmem:[%s477 + $0x10] sm:$0xff]
        %v481 = vld [vmem:[%s477 + $0x18] sm:$0xff]
        %v482 = vld [vmem:[%s2] sm:$0xff]
        %v483 = vld [vmem:[%s2 + $0x8] sm:$0xff]
        %485 = vset.pattern.permute.xlu0 0
        %486 = vperm.xlu0 %485, %v482
        %v487 = vpop.permute.xlu0 %486
        %490 = vset.pattern.permute.xlu0 0
        %491 = vperm.xlu0 %490, %v483
        %v492 = vpop.permute.xlu0 %491
        %v494 = vld [vmem:[%s4] sm:$0xff]
        %v495 = vld [vmem:[%s4 + $0x8] sm:$0xff]
        %v496 = vld [vmem:[%s4 + $0x10] sm:$0xff]
        %v497 = vld [vmem:[%s4 + $0x18] sm:$0xff]
        %v498 = vld [vmem:[%s4 + $0x20] sm:$0xff]
        %v499 = vld [vmem:[%s4 + $0x28] sm:$0xff]
        %501 = vset.pattern.permute.xlu0 0
        %502 = vperm.xlu0 %501, %v494
        %v503 = vpop.permute.xlu0 %502
        %506 = vset.pattern.permute.xlu0 0
        %507 = vperm.xlu0 %506, %v495
        %v508 = vpop.permute.xlu0 %507
        %511 = vset.pattern.permute.xlu0 0
        %512 = vperm.xlu0 %511, %v496
        %v513 = vpop.permute.xlu0 %512
        %516 = vset.pattern.permute.xlu0 0
        %517 = vperm.xlu0 %516, %v497
        %v518 = vpop.permute.xlu0 %517
        %521 = vset.pattern.permute.xlu0 0
        %522 = vperm.xlu0 %521, %v498
        %v523 = vpop.permute.xlu0 %522
        %526 = vset.pattern.permute.xlu0 0
        %527 = vperm.xlu0 %526, %v499
        %v528 = vpop.permute.xlu0 %527
        %v530 = vld [vmem:[%s6] sm:$0xff]
        %v531 = vld [vmem:[%s6 + $0x8] sm:$0xff]
        %v532 = vld [vmem:[%s6 + $0x10] sm:$0xff]
        %v533 = vld [vmem:[%s6 + $0x18] sm:$0xff]
        %535 = vset.pattern.permute.xlu0 0
        %536 = vperm.xlu0 %535, %v530
        %v537 = vpop.permute.xlu0 %536
        %540 = vset.pattern.permute.xlu0 0
        %541 = vperm.xlu0 %540, %v531
        %v542 = vpop.permute.xlu0 %541
        %545 = vset.pattern.permute.xlu0 0
        %546 = vperm.xlu0 %545, %v532
        %v547 = vpop.permute.xlu0 %546
        %550 = vset.pattern.permute.xlu0 0
        %551 = vperm.xlu0 %550, %v533
        %v552 = vpop.permute.xlu0 %551
        %v554 = vld [vmem:[%s7] sm:$0xff]
        %v555 = vld [vmem:[%s7 + $0x8] sm:$0xff]
        %557 = vset.pattern.permute.xlu0 0
        %558 = vperm.xlu0 %557, %v554
        %v559 = vpop.permute.xlu0 %558
        %562 = vset.pattern.permute.xlu0 0
        %563 = vperm.xlu0 %562, %v555
        %v564 = vpop.permute.xlu0 %563
        %v566 = vld [vmem:[%s8] sm:$0xff]
        %v567 = vld [vmem:[%s8 + $0x8] sm:$0xff]
        %569 = vset.pattern.permute.xlu0 0
        %570 = vperm.xlu0 %569, %v566
        %v571 = vpop.permute.xlu0 %570
        %574 = vset.pattern.permute.xlu0 0
        %575 = vperm.xlu0 %574, %v567
        %v576 = vpop.permute.xlu0 %575
        %v578 = vld [vmem:[%s9] sm:$0xff]
        %v579 = vld [vmem:[%s9 + $0x8] sm:$0xff]
        %v580 = vld [vmem:[%s9 + $0x10] sm:$0xff]
        %v581 = vld [vmem:[%s9 + $0x18] sm:$0xff]
        %583 = vset.pattern.permute.xlu0 0
        %584 = vperm.xlu0 %583, %v578
        %v585 = vpop.permute.xlu0 %584
        %588 = vset.pattern.permute.xlu0 0
        %589 = vperm.xlu0 %588, %v579
        %v590 = vpop.permute.xlu0 %589
        %593 = vset.pattern.permute.xlu0 0
        %594 = vperm.xlu0 %593, %v580
        %v595 = vpop.permute.xlu0 %594
        %598 = vset.pattern.permute.xlu0 0
        %599 = vperm.xlu0 %598, %v581
        %v600 = vpop.permute.xlu0 %599
        %v602 = vld [vmem:[%s10] sm:$0xff]
        %v603 = vld [vmem:[%s10 + $0x8] sm:$0xff]
        %v604 = vld [vmem:[%s10 + $0x10] sm:$0xff]
        %v605 = vld [vmem:[%s10 + $0x18] sm:$0xff]
        %607 = vset.pattern.permute.xlu0 0
        %608 = vperm.xlu0 %607, %v602
        %v609 = vpop.permute.xlu0 %608
        %612 = vset.pattern.permute.xlu0 0
        %613 = vperm.xlu0 %612, %v603
        %v614 = vpop.permute.xlu0 %613
        %617 = vset.pattern.permute.xlu0 0
        %618 = vperm.xlu0 %617, %v604
        %v619 = vpop.permute.xlu0 %618
        %622 = vset.pattern.permute.xlu0 0
        %623 = vperm.xlu0 %622, %v605
        %v624 = vpop.permute.xlu0 %623
        %v626 = vld [vmem:[%s1] sm:$0xff]
        %v627 = vld [vmem:[%s1 + $0x8] sm:$0xff]
        %v628 = vpack.c.bf16 %v627, %v626
        %v629 = vpack.c.bf16 %v464, %v463
        %v630 = vpack.c.bf16 %v469, %v468
        %v631 = vpack.c.bf16 %v474, %v473
        %v632 = vpack.c.bf16 %v479, %v478
        %v633 = vpack.c.bf16 %v466, %v465
        %v634 = vpack.c.bf16 %v471, %v470
        %v635 = vpack.c.bf16 %v476, %v475
        %v636 = vpack.c.bf16 %v481, %v480
        %vm637 = vcmask 261120
        %v639 = vsel %vm637, %v628, 0
        %641 = vmatprep.subr.bf16.mxu0 0
        %642 = vmatpush1.bf16.msra.mxu0 0
        %643 = vmatprep.subr.bf16.mxu0 0
        %644 = vmatpush1.bf16.msra.mxu0 0
        %645 = vmatprep.subr.bf16.mxu0 0
        %646 = vmatpush1.bf16.msra.mxu0 0
        %647 = vmatprep.subr.bf16.mxu0 0
        %648 = vmatpush1.bf16.msra.mxu0 0
        %649 = vmatprep.subr.bf16.mxu0 0
        %650 = vmatpush1.bf16.msra.mxu0 0
        %651 = vmatprep.subr.bf16.mxu0 0
        %652 = vmatpush1.bf16.msra.mxu0 0
        %653 = vmatprep.subr.bf16.mxu0 %v634
        %654 = vmatpush1.bf16.msra.mxu0 %v633
        %655 = vmatprep.subr.bf16.mxu0 %v630
        %656 = vmatpush1.bf16.msra.mxu0 %v629
        %657 = vmatprep.subr.bf16.mxu0 0
        %658 = vmatpush2.bf16.msra.mxu0 0
        %659 = vmatprep.subr.bf16.mxu0 0
        %660 = vmatpush2.bf16.msra.mxu0 0
        %661 = vmatprep.subr.bf16.mxu0 0
        %662 = vmatpush2.bf16.msra.mxu0 0
        %663 = vmatprep.subr.bf16.mxu0 0
        %664 = vmatpush2.bf16.msra.mxu0 0
        %665 = vmatprep.subr.bf16.mxu0 0
        %666 = vmatpush2.bf16.msra.mxu0 0
        %667 = vmatprep.subr.bf16.mxu0 0
        %668 = vmatpush2.bf16.msra.mxu0 0
        %669 = vmatprep.subr.bf16.mxu0 0
        %670 = vmatpush2.bf16.msra.mxu0 0
        %671 = vmatprep.subr.bf16.mxu0 0
        %672 = vmatpush2.bf16.msra.mxu0 0
        %673 = vmatprep.mubr.bf16.mxu0 0
        %674 = vmatmul.mubr.bf16.gmra.mxu0 %v639
        %v675 = vpop.f32.mrf.mxu0
        %v676 = vadd.f32 %v487, %v675
        %v677 = vpop.f32.mrf.mxu0
        %v678 = vadd.f32 %v487, %v677
        %v679 = vpop.f32.mrf.mxu0
        %v680 = vadd.f32 %v492, %v679
        %v681 = vpop.f32.mrf.mxu0
        %v682 = vadd.f32 %v492, %v681
        %683 = vdwg.mxu0
        %684 = vmatprep.subr.bf16.mxu0 0
        %685 = vmatpush1.bf16.msra.mxu0 0
        %686 = vmatprep.subr.bf16.mxu0 0
        %687 = vmatpush1.bf16.msra.mxu0 0
        %688 = vmatprep.subr.bf16.mxu0 0
        %689 = vmatpush1.bf16.msra.mxu0 0
        %690 = vmatprep.subr.bf16.mxu0 0
        %691 = vmatpush1.bf16.msra.mxu0 0
        %692 = vmatprep.subr.bf16.mxu0 0
        %693 = vmatpush1.bf16.msra.mxu0 0
        %694 = vmatprep.subr.bf16.mxu0 0
        %695 = vmatpush1.bf16.msra.mxu0 0
        %696 = vmatprep.subr.bf16.mxu0 %v636
        %697 = vmatpush1.bf16.msra.mxu0 %v635
        %698 = vmatprep.subr.bf16.mxu0 %v632
        %699 = vmatpush1.bf16.msra.mxu0 %v631
        %700 = vmatprep.subr.bf16.mxu0 0
        %701 = vmatpush2.bf16.msra.mxu0 0
        %702 = vmatprep.subr.bf16.mxu0 0
        %703 = vmatpush2.bf16.msra.mxu0 0
        %704 = vmatprep.subr.bf16.mxu0 0
        %705 = vmatpush2.bf16.msra.mxu0 0
        %706 = vmatprep.subr.bf16.mxu0 0
        %707 = vmatpush2.bf16.msra.mxu0 0
        %708 = vmatprep.subr.bf16.mxu0 0
        %709 = vmatpush2.bf16.msra.mxu0 0
        %710 = vmatprep.subr.bf16.mxu0 0
        %711 = vmatpush2.bf16.msra.mxu0 0
        %712 = vmatprep.subr.bf16.mxu0 0
        %713 = vmatpush2.bf16.msra.mxu0 0
        %714 = vmatprep.subr.bf16.mxu0 0
        %715 = vmatpush2.bf16.msra.mxu0 0
        %716 = vmatprep.mubr.bf16.mxu0 0
        %717 = vmatmul.mubr.bf16.gmra.mxu0 %v639
        %v718 = vpop.f32.mrf.mxu0
        %v719 = vadd.f32 %v487, %v718
        %v720 = vpop.f32.mrf.mxu0
        %v721 = vadd.f32 %v487, %v720
        %v722 = vpop.f32.mrf.mxu0
        %v723 = vadd.f32 %v492, %v722
        %v724 = vpop.f32.mrf.mxu0
        %v725 = vadd.f32 %v492, %v724
        %726 = vdwg.mxu0
        %v727 = vmul.f32 %v676, 0.5
        %v728 = vmul.f32 %v678, 0.5
        %v729 = vmul.f32 %v719, 0.5
        %v730 = vmul.f32 %v721, 0.5
        %v731 = vmul.f32 %v680, 0.5
        %v732 = vmul.f32 %v682, 0.5
        %v733 = vmul.f32 %v723, 0.5
        %v734 = vmul.f32 %v725, 0.5
        %v735 = vmul.f32 %v676, 0.044715
        %v736 = vmul.f32 %v678, 0.044715
        %v737 = vmul.f32 %v719, 0.044715
        %v738 = vmul.f32 %v721, 0.044715
        %v739 = vmul.f32 %v680, 0.044715
        %v740 = vmul.f32 %v682, 0.044715
        %v741 = vmul.f32 %v723, 0.044715
        %v742 = vmul.f32 %v725, 0.044715
        %v743 = vmul.f32 %v735, %v676
        %v744 = vmul.f32 %v736, %v678
        %v745 = vmul.f32 %v737, %v719
        %v746 = vmul.f32 %v738, %v721
        %v747 = vmul.f32 %v739, %v680
        %v748 = vmul.f32 %v740, %v682
        %v749 = vmul.f32 %v741, %v723
        %v750 = vmul.f32 %v742, %v725
        %v751 = vmul.f32 %v743, %v676
        %v752 = vmul.f32 %v744, %v678
        %v753 = vmul.f32 %v745, %v719
        %v754 = vmul.f32 %v746, %v721
        %v755 = vmul.f32 %v747, %v680
        %v756 = vmul.f32 %v748, %v682
        %v757 = vmul.f32 %v749, %v723
        %v758 = vmul.f32 %v750, %v725
        %v759 = vadd.f32 %v676, %v751
        %v760 = vadd.f32 %v678, %v752
        %v761 = vadd.f32 %v719, %v753
        %v762 = vadd.f32 %v721, %v754
        %v763 = vadd.f32 %v680, %v755
        %v764 = vadd.f32 %v682, %v756
        %v765 = vadd.f32 %v723, %v757
        %v766 = vadd.f32 %v725, %v758
        %v767 = vmul.f32 %v759, 0.7978846
        %v768 = vmul.f32 %v760, 0.7978846
        %v769 = vmul.f32 %v761, 0.7978846
        %v770 = vmul.f32 %v762, 0.7978846
        %v771 = vmul.f32 %v763, 0.7978846
        %v772 = vmul.f32 %v764, 0.7978846
        %v773 = vmul.f32 %v765, 0.7978846
        %v774 = vmul.f32 %v766, 0.7978846
        %v775 = vtanh.pop %v767
        %v776 = vtanh.pop %v768
        %v777 = vtanh.pop %v769
        %v778 = vtanh.pop %v770
        %v779 = vtanh.pop %v771
        %v780 = vtanh.pop %v772
        %v781 = vtanh.pop %v773
        %v782 = vtanh.pop %v774
        %v783 = vadd.f32 %v775, 1.0
        %v784 = vadd.f32 %v776, 1.0
        %v785 = vadd.f32 %v777, 1.0
        %v786 = vadd.f32 %v778, 1.0
        %v787 = vadd.f32 %v779, 1.0
        %v788 = vadd.f32 %v780, 1.0
        %v789 = vadd.f32 %v781, 1.0
        %v790 = vadd.f32 %v782, 1.0
        %v791 = vmul.f32 %v727, %v783
        %v792 = vmul.f32 %v728, %v784
        %v793 = vmul.f32 %v729, %v785
        %v794 = vmul.f32 %v730, %v786
        %v795 = vmul.f32 %v731, %v787
        %v796 = vmul.f32 %v732, %v788
        %v797 = vmul.f32 %v733, %v789
        %v798 = vmul.f32 %v734, %v790
        %v799 = vld [vmem:[%s3] sm:$0xff]
        %v800 = vld [vmem:[%s3 + $0x8] sm:$0xff]
        %v801 = vld [vmem:[%s3 + $0x10] sm:$0xff]
        %v802 = vld [vmem:[%s3 + $0x18] sm:$0xff]
        %v803 = vld [vmem:[%s3 + $0x20] sm:$0xff]
        %v804 = vld [vmem:[%s3 + $0x28] sm:$0xff]
        %v805 = vpack.c.bf16 %v800, %v799
        %v806 = vpack.c.bf16 %v802, %v801
        %v807 = vpack.c.bf16 %v804, %v803
        %v808 = vpack.c.bf16 %v795, %v791
        %v809 = vpack.c.bf16 %v796, %v792
        %v810 = vpack.c.bf16 %v797, %v793
        %v811 = vpack.c.bf16 %v798, %v794
        %vm812 = vcmask 130048
        %v814 = vsel %vm812, %v805, 0
        %v817 = vsel %vm812, %v806, 0
        %v820 = vsel %vm812, %v807, 0
        %822 = vmatprep.subr.bf16.mxu0 0
        %823 = vmatpush1.bf16.msra.mxu0 0
        %824 = vmatprep.subr.bf16.mxu0 0
        %825 = vmatpush1.bf16.msra.mxu0 0
        %826 = vmatprep.subr.bf16.mxu0 0
        %827 = vmatpush1.bf16.msra.mxu0 0
        %828 = vmatprep.subr.bf16.mxu0 0
        %829 = vmatpush1.bf16.msra.mxu0 0
        %830 = vmatprep.subr.bf16.mxu0 0
        %831 = vmatpush1.bf16.msra.mxu0 0
        %832 = vmatprep.subr.bf16.mxu0 0
        %833 = vmatpush1.bf16.msra.mxu0 0
        %834 = vmatprep.subr.bf16.mxu0 0
        %835 = vmatpush1.bf16.msra.mxu0 0
        %836 = vmatprep.subr.bf16.mxu0 %v809
        %837 = vmatpush1.bf16.msra.mxu0 %v808
        %838 = vmatprep.subr.bf16.mxu0 0
        %839 = vmatpush2.bf16.msra.mxu0 0
        %840 = vmatprep.subr.bf16.mxu0 0
        %841 = vmatpush2.bf16.msra.mxu0 0
        %842 = vmatprep.subr.bf16.mxu0 0
        %843 = vmatpush2.bf16.msra.mxu0 0
        %844 = vmatprep.subr.bf16.mxu0 0
        %845 = vmatpush2.bf16.msra.mxu0 0
        %846 = vmatprep.subr.bf16.mxu0 0
        %847 = vmatpush2.bf16.msra.mxu0 0
        %848 = vmatprep.subr.bf16.mxu0 0
        %849 = vmatpush2.bf16.msra.mxu0 0
        %850 = vmatprep.subr.bf16.mxu0 0
        %851 = vmatpush2.bf16.msra.mxu0 0
        %852 = vmatprep.subr.bf16.mxu0 0
        %853 = vmatpush2.bf16.msra.mxu0 0
        %854 = vmatprep.mubr.bf16.mxu0 0
        %855 = vmatmul.mubr.bf16.gmra.mxu0 %v814
        %v856 = vpop.f32.mrf.mxu0
        %v857 = vadd.f32 %v503, %v856
        %v858 = vpop.f32.mrf.mxu0
        %v859 = vadd.f32 %v503, %v858
        %v860 = vpop.f32.mrf.mxu0
        %v861 = vadd.f32 %v508, %v860
        %v862 = vpop.f32.mrf.mxu0
        %v863 = vadd.f32 %v508, %v862
        %864 = vmatprep.mubr.bf16.mxu0 0
        %865 = vmatmul.mubr.bf16.gmra.mxu0 %v817
        %v866 = vpop.f32.mrf.mxu0
        %v867 = vadd.f32 %v513, %v866
        %v868 = vpop.f32.mrf.mxu0
        %v869 = vadd.f32 %v513, %v868
        %v870 = vpop.f32.mrf.mxu0
        %v871 = vadd.f32 %v518, %v870
        %v872 = vpop.f32.mrf.mxu0
        %v873 = vadd.f32 %v518, %v872
        %874 = vmatprep.mubr.bf16.mxu0 0
        %875 = vmatmul.mubr.bf16.gmra.mxu0 %v820
        %v876 = vpop.f32.mrf.mxu0
        %v877 = vadd.f32 %v523, %v876
        %v878 = vpop.f32.mrf.mxu0
        %v879 = vadd.f32 %v523, %v878
        %v880 = vpop.f32.mrf.mxu0
        %v881 = vadd.f32 %v528, %v880
        %v882 = vpop.f32.mrf.mxu0
        %v883 = vadd.f32 %v528, %v882
        %884 = vdwg.mxu0
        %885 = vmatprep.subr.bf16.mxu0 0
        %886 = vmatpush1.bf16.msra.mxu0 0
        %887 = vmatprep.subr.bf16.mxu0 0
        %888 = vmatpush1.bf16.msra.mxu0 0
        %889 = vmatprep.subr.bf16.mxu0 0
        %890 = vmatpush1.bf16.msra.mxu0 0
        %891 = vmatprep.subr.bf16.mxu0 0
        %892 = vmatpush1.bf16.msra.mxu0 0
        %893 = vmatprep.subr.bf16.mxu0 0
        %894 = vmatpush1.bf16.msra.mxu0 0
        %895 = vmatprep.subr.bf16.mxu0 0
        %896 = vmatpush1.bf16.msra.mxu0 0
        %897 = vmatprep.subr.bf16.mxu0 0
        %898 = vmatpush1.bf16.msra.mxu0 0
        %899 = vmatprep.subr.bf16.mxu0 %v811
        %900 = vmatpush1.bf16.msra.mxu0 %v810
        %901 = vmatprep.subr.bf16.mxu0 0
        %902 = vmatpush2.bf16.msra.mxu0 0
        %903 = vmatprep.subr.bf16.mxu0 0
        %904 = vmatpush2.bf16.msra.mxu0 0
        %905 = vmatprep.subr.bf16.mxu0 0
        %906 = vmatpush2.bf16.msra.mxu0 0
        %907 = vmatprep.subr.bf16.mxu0 0
        %908 = vmatpush2.bf16.msra.mxu0 0
        %909 = vmatprep.subr.bf16.mxu0 0
        %910 = vmatpush2.bf16.msra.mxu0 0
        %911 = vmatprep.subr.bf16.mxu0 0
        %912 = vmatpush2.bf16.msra.mxu0 0
        %913 = vmatprep.subr.bf16.mxu0 0
        %914 = vmatpush2.bf16.msra.mxu0 0
        %915 = vmatprep.subr.bf16.mxu0 0
        %916 = vmatpush2.bf16.msra.mxu0 0
        %917 = vmatprep.mubr.bf16.mxu0 0
        %918 = vmatmul.mubr.bf16.gmra.mxu0 %v814
        %v919 = vpop.f32.mrf.mxu0
        %v920 = vadd.f32 %v503, %v919
        %v921 = vpop.f32.mrf.mxu0
        %v922 = vadd.f32 %v503, %v921
        %v923 = vpop.f32.mrf.mxu0
        %v924 = vadd.f32 %v508, %v923
        %v925 = vpop.f32.mrf.mxu0
        %v926 = vadd.f32 %v508, %v925
        %927 = vmatprep.mubr.bf16.mxu0 0
        %928 = vmatmul.mubr.bf16.gmra.mxu0 %v817
        %v929 = vpop.f32.mrf.mxu0
        %v930 = vadd.f32 %v513, %v929
        %v931 = vpop.f32.mrf.mxu0
        %v932 = vadd.f32 %v513, %v931
        %v933 = vpop.f32.mrf.mxu0
        %v934 = vadd.f32 %v518, %v933
        %v935 = vpop.f32.mrf.mxu0
        %v936 = vadd.f32 %v518, %v935
        %937 = vmatprep.mubr.bf16.mxu0 0
        %938 = vmatmul.mubr.bf16.gmra.mxu0 %v820
        %v939 = vpop.f32.mrf.mxu0
        %v940 = vadd.f32 %v523, %v939
        %v941 = vpop.f32.mrf.mxu0
        %v942 = vadd.f32 %v523, %v941
        %v943 = vpop.f32.mrf.mxu0
        %v944 = vadd.f32 %v528, %v943
        %v945 = vpop.f32.mrf.mxu0
        %v946 = vadd.f32 %v528, %v945
        %947 = vdwg.mxu0
        %v948 = vmul.f32 %v857, 0.25
        %v949 = vmul.f32 %v859, 0.25
        %v950 = vmul.f32 %v920, 0.25
        %v951 = vmul.f32 %v922, 0.25
        %v952 = vmul.f32 %v861, 0.25
        %v953 = vmul.f32 %v863, 0.25
        %v954 = vmul.f32 %v924, 0.25
        %v955 = vmul.f32 %v926, 0.25
        %v956 = vmul.f32 %v948, %v867
        %v957 = vmul.f32 %v952, %v871
        %v958 = vadd.f32 %v956, %v957
        %v959 = vrot.slane %v958, 4
        %v960 = vadd.f32 %v958, %v959
        %v961 = vrot.slane %v960, 2
        %v962 = vadd.f32 %v960, %v961
        %v963 = vrot.slane %v962, 1
        %v964 = vadd.f32 %v962, %v963
        %v965 = vmul.f32 %v948, %v869
        %v966 = vmul.f32 %v952, %v873
        %v967 = vadd.f32 %v965, %v966
        %v968 = vrot.slane %v967, 4
        %v969 = vadd.f32 %v967, %v968
        %v970 = vrot.slane %v969, 2
        %v971 = vadd.f32 %v969, %v970
        %v972 = vrot.slane %v971, 1
        %v973 = vadd.f32 %v971, %v972
        %v974 = vmul.f32 %v948, %v930
        %v975 = vmul.f32 %v952, %v934
        %v976 = vadd.f32 %v974, %v975
        %v977 = vrot.slane %v976, 4
        %v978 = vadd.f32 %v976, %v977
        %v979 = vrot.slane %v978, 2
        %v980 = vadd.f32 %v978, %v979
        %v981 = vrot.slane %v980, 1
        %v982 = vadd.f32 %v980, %v981
        %v983 = vmul.f32 %v948, %v932
        %v984 = vmul.f32 %v952, %v936
        %v985 = vadd.f32 %v983, %v984
        %v986 = vrot.slane %v985, 4
        %v987 = vadd.f32 %v985, %v986
        %v988 = vrot.slane %v987, 2
        %v989 = vadd.f32 %v987, %v988
        %v990 = vrot.slane %v989, 1
        %v991 = vadd.f32 %v989, %v990
        %v992 = vmax.f32 %v964, %v973
        %v993 = vmax.f32 %v992, %v982
        %v994 = vmax.f32 %v993, %v991
        %v995 = vsub.f32 %v964, %v994
        %v996 = vmul.f32 %v995, 1.442695
        %v997 = vpow.pop %v996
        %v998 = vsub.f32 %v973, %v994
        %v999 = vmul.f32 %v998, 1.442695
        %v1000 = vpow.pop %v999
        %v1001 = vsub.f32 %v982, %v994
        %v1002 = vmul.f32 %v1001, 1.442695
        %v1003 = vpow.pop %v1002
        %v1004 = vsub.f32 %v991, %v994
        %v1005 = vmul.f32 %v1004, 1.442695
        %v1006 = vpow.pop %v1005
        %v1007 = vadd.f32 %v997, %v1000
        %v1008 = vadd.f32 %v1007, %v1003
        %v1009 = vadd.f32 %v1008, %v1006
        %v1010 = vrcp.pop %v1009
        %v1011 = vmul.f32 %v1009, %v1010
        %v1012 = vsub.f32 2.0, %v1011
        %v1013 = vmul.f32 %v1010, %v1012
        %v1014 = vmul.f32 %v997, %v1013
        %v1015 = vmul.f32 %v1014, %v877
        %v1016 = vmul.f32 %v1014, %v881
        %v1017 = vmul.f32 %v1000, %v1013
        %v1018 = vmul.f32 %v1017, %v879
        %v1019 = vmul.f32 %v1017, %v883
        %v1020 = vadd.f32 %v1015, %v1018
        %v1021 = vadd.f32 %v1016, %v1019
        %v1022 = vmul.f32 %v1003, %v1013
        %v1023 = vmul.f32 %v1022, %v940
        %v1024 = vmul.f32 %v1022, %v944
        %v1025 = vadd.f32 %v1020, %v1023
        %v1026 = vadd.f32 %v1021, %v1024
        %v1027 = vmul.f32 %v1006, %v1013
        %v1028 = vmul.f32 %v1027, %v942
        %v1029 = vmul.f32 %v1027, %v946
        %v1030 = vadd.f32 %v1025, %v1028
        %v1031 = vadd.f32 %v1026, %v1029
        %v1032 = vmul.f32 %v949, %v867
        %v1033 = vmul.f32 %v953, %v871
        %v1034 = vadd.f32 %v1032, %v1033
        %v1035 = vrot.slane %v1034, 4
        %v1036 = vadd.f32 %v1034, %v1035
        %v1037 = vrot.slane %v1036, 2
        %v1038 = vadd.f32 %v1036, %v1037
        %v1039 = vrot.slane %v1038, 1
        %v1040 = vadd.f32 %v1038, %v1039
        %v1041 = vmul.f32 %v949, %v869
        %v1042 = vmul.f32 %v953, %v873
        %v1043 = vadd.f32 %v1041, %v1042
        %v1044 = vrot.slane %v1043, 4
        %v1045 = vadd.f32 %v1043, %v1044
        %v1046 = vrot.slane %v1045, 2
        %v1047 = vadd.f32 %v1045, %v1046
        %v1048 = vrot.slane %v1047, 1
        %v1049 = vadd.f32 %v1047, %v1048
        %v1050 = vmul.f32 %v949, %v930
        %v1051 = vmul.f32 %v953, %v934
        %v1052 = vadd.f32 %v1050, %v1051
        %v1053 = vrot.slane %v1052, 4
        %v1054 = vadd.f32 %v1052, %v1053
        %v1055 = vrot.slane %v1054, 2
        %v1056 = vadd.f32 %v1054, %v1055
        %v1057 = vrot.slane %v1056, 1
        %v1058 = vadd.f32 %v1056, %v1057
        %v1059 = vmul.f32 %v949, %v932
        %v1060 = vmul.f32 %v953, %v936
        %v1061 = vadd.f32 %v1059, %v1060
        %v1062 = vrot.slane %v1061, 4
        %v1063 = vadd.f32 %v1061, %v1062
        %v1064 = vrot.slane %v1063, 2
        %v1065 = vadd.f32 %v1063, %v1064
        %v1066 = vrot.slane %v1065, 1
        %v1067 = vadd.f32 %v1065, %v1066
        %v1068 = vmax.f32 %v1040, %v1049
        %v1069 = vmax.f32 %v1068, %v1058
        %v1070 = vmax.f32 %v1069, %v1067
        %v1071 = vsub.f32 %v1040, %v1070
        %v1072 = vmul.f32 %v1071, 1.442695
        %v1073 = vpow.pop %v1072
        %v1074 = vsub.f32 %v1049, %v1070
        %v1075 = vmul.f32 %v1074, 1.442695
        %v1076 = vpow.pop %v1075
        %v1077 = vsub.f32 %v1058, %v1070
        %v1078 = vmul.f32 %v1077, 1.442695
        %v1079 = vpow.pop %v1078
        %v1080 = vsub.f32 %v1067, %v1070
        %v1081 = vmul.f32 %v1080, 1.442695
        %v1082 = vpow.pop %v1081
        %v1083 = vadd.f32 %v1073, %v1076
        %v1084 = vadd.f32 %v1083, %v1079
        %v1085 = vadd.f32 %v1084, %v1082
        %v1086 = vrcp.pop %v1085
        %v1087 = vmul.f32 %v1085, %v1086
        %v1088 = vsub.f32 2.0, %v1087
        %v1089 = vmul.f32 %v1086, %v1088
        %v1090 = vmul.f32 %v1073, %v1089
        %v1091 = vmul.f32 %v1090, %v877
        %v1092 = vmul.f32 %v1090, %v881
        %v1093 = vmul.f32 %v1076, %v1089
        %v1094 = vmul.f32 %v1093, %v879
        %v1095 = vmul.f32 %v1093, %v883
        %v1096 = vadd.f32 %v1091, %v1094
        %v1097 = vadd.f32 %v1092, %v1095
        %v1098 = vmul.f32 %v1079, %v1089
        %v1099 = vmul.f32 %v1098, %v940
        %v1100 = vmul.f32 %v1098, %v944
        %v1101 = vadd.f32 %v1096, %v1099
        %v1102 = vadd.f32 %v1097, %v1100
        %v1103 = vmul.f32 %v1082, %v1089
        %v1104 = vmul.f32 %v1103, %v942
        %v1105 = vmul.f32 %v1103, %v946
        %v1106 = vadd.f32 %v1101, %v1104
        %v1107 = vadd.f32 %v1102, %v1105
        %v1108 = vmul.f32 %v950, %v867
        %v1109 = vmul.f32 %v954, %v871
        %v1110 = vadd.f32 %v1108, %v1109
        %v1111 = vrot.slane %v1110, 4
        %v1112 = vadd.f32 %v1110, %v1111
        %v1113 = vrot.slane %v1112, 2
        %v1114 = vadd.f32 %v1112, %v1113
        %v1115 = vrot.slane %v1114, 1
        %v1116 = vadd.f32 %v1114, %v1115
        %v1117 = vmul.f32 %v950, %v869
        %v1118 = vmul.f32 %v954, %v873
        %v1119 = vadd.f32 %v1117, %v1118
        %v1120 = vrot.slane %v1119, 4
        %v1121 = vadd.f32 %v1119, %v1120
        %v1122 = vrot.slane %v1121, 2
        %v1123 = vadd.f32 %v1121, %v1122
        %v1124 = vrot.slane %v1123, 1
        %v1125 = vadd.f32 %v1123, %v1124
        %v1126 = vmul.f32 %v950, %v930
        %v1127 = vmul.f32 %v954, %v934
        %v1128 = vadd.f32 %v1126, %v1127
        %v1129 = vrot.slane %v1128, 4
        %v1130 = vadd.f32 %v1128, %v1129
        %v1131 = vrot.slane %v1130, 2
        %v1132 = vadd.f32 %v1130, %v1131
        %v1133 = vrot.slane %v1132, 1
        %v1134 = vadd.f32 %v1132, %v1133
        %v1135 = vmul.f32 %v950, %v932
        %v1136 = vmul.f32 %v954, %v936
        %v1137 = vadd.f32 %v1135, %v1136
        %v1138 = vrot.slane %v1137, 4
        %v1139 = vadd.f32 %v1137, %v1138
        %v1140 = vrot.slane %v1139, 2
        %v1141 = vadd.f32 %v1139, %v1140
        %v1142 = vrot.slane %v1141, 1
        %v1143 = vadd.f32 %v1141, %v1142
        %v1144 = vmax.f32 %v1116, %v1125
        %v1145 = vmax.f32 %v1144, %v1134
        %v1146 = vmax.f32 %v1145, %v1143
        %v1147 = vsub.f32 %v1116, %v1146
        %v1148 = vmul.f32 %v1147, 1.442695
        %v1149 = vpow.pop %v1148
        %v1150 = vsub.f32 %v1125, %v1146
        %v1151 = vmul.f32 %v1150, 1.442695
        %v1152 = vpow.pop %v1151
        %v1153 = vsub.f32 %v1134, %v1146
        %v1154 = vmul.f32 %v1153, 1.442695
        %v1155 = vpow.pop %v1154
        %v1156 = vsub.f32 %v1143, %v1146
        %v1157 = vmul.f32 %v1156, 1.442695
        %v1158 = vpow.pop %v1157
        %v1159 = vadd.f32 %v1149, %v1152
        %v1160 = vadd.f32 %v1159, %v1155
        %v1161 = vadd.f32 %v1160, %v1158
        %v1162 = vrcp.pop %v1161
        %v1163 = vmul.f32 %v1161, %v1162
        %v1164 = vsub.f32 2.0, %v1163
        %v1165 = vmul.f32 %v1162, %v1164
        %v1166 = vmul.f32 %v1149, %v1165
        %v1167 = vmul.f32 %v1166, %v877
        %v1168 = vmul.f32 %v1166, %v881
        %v1169 = vmul.f32 %v1152, %v1165
        %v1170 = vmul.f32 %v1169, %v879
        %v1171 = vmul.f32 %v1169, %v883
        %v1172 = vadd.f32 %v1167, %v1170
        %v1173 = vadd.f32 %v1168, %v1171
        %v1174 = vmul.f32 %v1155, %v1165
        %v1175 = vmul.f32 %v1174, %v940
        %v1176 = vmul.f32 %v1174, %v944
        %v1177 = vadd.f32 %v1172, %v1175
        %v1178 = vadd.f32 %v1173, %v1176
        %v1179 = vmul.f32 %v1158, %v1165
        %v1180 = vmul.f32 %v1179, %v942
        %v1181 = vmul.f32 %v1179, %v946
        %v1182 = vadd.f32 %v1177, %v1180
        %v1183 = vadd.f32 %v1178, %v1181
        %v1184 = vmul.f32 %v951, %v867
        %v1185 = vmul.f32 %v955, %v871
        %v1186 = vadd.f32 %v1184, %v1185
        %v1187 = vrot.slane %v1186, 4
        %v1188 = vadd.f32 %v1186, %v1187
        %v1189 = vrot.slane %v1188, 2
        %v1190 = vadd.f32 %v1188, %v1189
        %v1191 = vrot.slane %v1190, 1
        %v1192 = vadd.f32 %v1190, %v1191
        %v1193 = vmul.f32 %v951, %v869
        %v1194 = vmul.f32 %v955, %v873
        %v1195 = vadd.f32 %v1193, %v1194
        %v1196 = vrot.slane %v1195, 4
        %v1197 = vadd.f32 %v1195, %v1196
        %v1198 = vrot.slane %v1197, 2
        %v1199 = vadd.f32 %v1197, %v1198
        %v1200 = vrot.slane %v1199, 1
        %v1201 = vadd.f32 %v1199, %v1200
        %v1202 = vmul.f32 %v951, %v930
        %v1203 = vmul.f32 %v955, %v934
        %v1204 = vadd.f32 %v1202, %v1203
        %v1205 = vrot.slane %v1204, 4
        %v1206 = vadd.f32 %v1204, %v1205
        %v1207 = vrot.slane %v1206, 2
        %v1208 = vadd.f32 %v1206, %v1207
        %v1209 = vrot.slane %v1208, 1
        %v1210 = vadd.f32 %v1208, %v1209
        %v1211 = vmul.f32 %v951, %v932
        %v1212 = vmul.f32 %v955, %v936
        %v1213 = vadd.f32 %v1211, %v1212
        %v1214 = vrot.slane %v1213, 4
        %v1215 = vadd.f32 %v1213, %v1214
        %v1216 = vrot.slane %v1215, 2
        %v1217 = vadd.f32 %v1215, %v1216
        %v1218 = vrot.slane %v1217, 1
        %v1219 = vadd.f32 %v1217, %v1218
        %v1220 = vmax.f32 %v1192, %v1201
        %v1221 = vmax.f32 %v1220, %v1210
        %v1222 = vmax.f32 %v1221, %v1219
        %v1223 = vsub.f32 %v1192, %v1222
        %v1224 = vmul.f32 %v1223, 1.442695
        %v1225 = vpow.pop %v1224
        %v1226 = vsub.f32 %v1201, %v1222
        %v1227 = vmul.f32 %v1226, 1.442695
        %v1228 = vpow.pop %v1227
        %v1229 = vsub.f32 %v1210, %v1222
        %v1230 = vmul.f32 %v1229, 1.442695
        %v1231 = vpow.pop %v1230
        %v1232 = vsub.f32 %v1219, %v1222
        %v1233 = vmul.f32 %v1232, 1.442695
        %v1234 = vpow.pop %v1233
        %v1235 = vadd.f32 %v1225, %v1228
        %v1236 = vadd.f32 %v1235, %v1231
        %v1237 = vadd.f32 %v1236, %v1234
        %v1238 = vrcp.pop %v1237
        %v1239 = vmul.f32 %v1237, %v1238
        %v1240 = vsub.f32 2.0, %v1239
        %v1241 = vmul.f32 %v1238, %v1240
        %v1242 = vmul.f32 %v1225, %v1241
        %v1243 = vmul.f32 %v1242, %v877
        %v1244 = vmul.f32 %v1242, %v881
        %v1245 = vmul.f32 %v1228, %v1241
        %v1246 = vmul.f32 %v1245, %v879
        %v1247 = vmul.f32 %v1245, %v883
        %v1248 = vadd.f32 %v1243, %v1246
        %v1249 = vadd.f32 %v1244, %v1247
        %v1250 = vmul.f32 %v1231, %v1241
        %v1251 = vmul.f32 %v1250, %v940
        %v1252 = vmul.f32 %v1250, %v944
        %v1253 = vadd.f32 %v1248, %v1251
        %v1254 = vadd.f32 %v1249, %v1252
        %v1255 = vmul.f32 %v1234, %v1241
        %v1256 = vmul.f32 %v1255, %v942
        %v1257 = vmul.f32 %v1255, %v946
        %v1258 = vadd.f32 %v1253, %v1256
        %v1259 = vadd.f32 %v1254, %v1257
        %vm1260 = vcmask 1040384
        %v1261 = vsel %vm1260, %v1014, %v1017
        %vm1262 = vcmask 1041408
        %v1263 = vsel %vm1262, %v1261, %v1022
        %vm1264 = vcmask 1042432
        %v1265 = vsel %vm1264, %v1263, %v1027
        %vm1266 = vcmask 1043456
        %v1267 = vsel %vm1266, %v1265, %v1090
        %vm1268 = vcmask 1044480
        %v1269 = vsel %vm1268, %v1267, %v1093
        %vm1270 = vcmask 1045504
        %v1271 = vsel %vm1270, %v1269, %v1098
        %vm1272 = vcmask 1046528
        %v1273 = vsel %vm1272, %v1271, %v1103
        %v1274 = vsel %vm1260, %v1166, %v1169
        %v1275 = vsel %vm1262, %v1274, %v1174
        %v1276 = vsel %vm1264, %v1275, %v1179
        %v1277 = vsel %vm1266, %v1276, %v1242
        %v1278 = vsel %vm1268, %v1277, %v1245
        %v1279 = vsel %vm1270, %v1278, %v1250
        %v1280 = vsel %vm1272, %v1279, %v1255
        %1281 = vst [vmem:[%s461] sm:$0xff] %v1273
        %1282 = vst [vmem:[%s461 + $0x8] sm:$0xff] %v1280
        %v1283 = vadd.f32 %v1030, %v791
        %v1284 = vadd.f32 %v1106, %v792
        %v1285 = vadd.f32 %v1182, %v793
        %v1286 = vadd.f32 %v1258, %v794
        %v1287 = vadd.f32 %v1031, %v795
        %v1288 = vadd.f32 %v1107, %v796
        %v1289 = vadd.f32 %v1183, %v797
        %v1290 = vadd.f32 %v1259, %v798
        %v1291 = vadd.f32 %v1283, %v1287
        %v1292 = vrot.slane %v1291, 4
        %v1293 = vadd.f32 %v1291, %v1292
        %v1294 = vrot.slane %v1293, 2
        %v1295 = vadd.f32 %v1293, %v1294
        %v1296 = vrot.slane %v1295, 1
        %v1297 = vadd.f32 %v1295, %v1296
        %v1298 = vadd.f32 %v1284, %v1288
        %v1299 = vrot.slane %v1298, 4
        %v1300 = vadd.f32 %v1298, %v1299
        %v1301 = vrot.slane %v1300, 2
        %v1302 = vadd.f32 %v1300, %v1301
        %v1303 = vrot.slane %v1302, 1
        %v1304 = vadd.f32 %v1302, %v1303
        %v1305 = vadd.f32 %v1285, %v1289
        %v1306 = vrot.slane %v1305, 4
        %v1307 = vadd.f32 %v1305, %v1306
        %v1308 = vrot.slane %v1307, 2
        %v1309 = vadd.f32 %v1307, %v1308
        %v1310 = vrot.slane %v1309, 1
        %v1311 = vadd.f32 %v1309, %v1310
        %v1312 = vadd.f32 %v1286, %v1290
        %v1313 = vrot.slane %v1312, 4
        %v1314 = vadd.f32 %v1312, %v1313
        %v1315 = vrot.slane %v1314, 2
        %v1316 = vadd.f32 %v1314, %v1315
        %v1317 = vrot.slane %v1316, 1
        %v1318 = vadd.f32 %v1316, %v1317
        %v1319 = vrcp.pop 16.0
        %v1320 = vmul.f32 %v1297, %v1319
        %v1321 = vmul.f32 %v1304, %v1319
        %v1322 = vmul.f32 %v1311, %v1319
        %v1323 = vmul.f32 %v1318, %v1319
        %v1324 = vsub.f32 %v1283, %v1320
        %v1325 = vsub.f32 %v1284, %v1321
        %v1326 = vsub.f32 %v1285, %v1322
        %v1327 = vsub.f32 %v1286, %v1323
        %v1328 = vsub.f32 %v1287, %v1320
        %v1329 = vsub.f32 %v1288, %v1321
        %v1330 = vsub.f32 %v1289, %v1322
        %v1331 = vsub.f32 %v1290, %v1323
        %v1332 = vmul.f32 %v1324, %v1324
        %v1333 = vmul.f32 %v1325, %v1325
        %v1334 = vmul.f32 %v1326, %v1326
        %v1335 = vmul.f32 %v1327, %v1327
        %v1336 = vmul.f32 %v1328, %v1328
        %v1337 = vmul.f32 %v1329, %v1329
        %v1338 = vmul.f32 %v1330, %v1330
        %v1339 = vmul.f32 %v1331, %v1331
        %v1340 = vadd.f32 %v1332, %v1336
        %v1341 = vrot.slane %v1340, 4
        %v1342 = vadd.f32 %v1340, %v1341
        %v1343 = vrot.slane %v1342, 2
        %v1344 = vadd.f32 %v1342, %v1343
        %v1345 = vrot.slane %v1344, 1
        %v1346 = vadd.f32 %v1344, %v1345
        %v1347 = vadd.f32 %v1333, %v1337
        %v1348 = vrot.slane %v1347, 4
        %v1349 = vadd.f32 %v1347, %v1348
        %v1350 = vrot.slane %v1349, 2
        %v1351 = vadd.f32 %v1349, %v1350
        %v1352 = vrot.slane %v1351, 1
        %v1353 = vadd.f32 %v1351, %v1352
        %v1354 = vadd.f32 %v1334, %v1338
        %v1355 = vrot.slane %v1354, 4
        %v1356 = vadd.f32 %v1354, %v1355
        %v1357 = vrot.slane %v1356, 2
        %v1358 = vadd.f32 %v1356, %v1357
        %v1359 = vrot.slane %v1358, 1
        %v1360 = vadd.f32 %v1358, %v1359
        %v1361 = vadd.f32 %v1335, %v1339
        %v1362 = vrot.slane %v1361, 4
        %v1363 = vadd.f32 %v1361, %v1362
        %v1364 = vrot.slane %v1363, 2
        %v1365 = vadd.f32 %v1363, %v1364
        %v1366 = vrot.slane %v1365, 1
        %v1367 = vadd.f32 %v1365, %v1366
        %v1368 = vmul.f32 %v1346, %v1319
        %v1369 = vmul.f32 %v1353, %v1319
        %v1370 = vmul.f32 %v1360, %v1319
        %v1371 = vmul.f32 %v1367, %v1319
        %v1372 = vadd.f32 %v1368, 1e-05
        %v1373 = vadd.f32 %v1369, 1e-05
        %v1374 = vadd.f32 %v1370, 1e-05
        %v1375 = vadd.f32 %v1371, 1e-05
        %v1376 = vrsqrt.pop %v1372
        %v1377 = vrsqrt.pop %v1373
        %v1378 = vrsqrt.pop %v1374
        %v1379 = vrsqrt.pop %v1375
        %v1380 = vmul.f32 %v1324, %v1376
        %v1381 = vmul.f32 %v1325, %v1377
        %v1382 = vmul.f32 %v1326, %v1378
        %v1383 = vmul.f32 %v1327, %v1379
        %v1384 = vmul.f32 %v1328, %v1376
        %v1385 = vmul.f32 %v1329, %v1377
        %v1386 = vmul.f32 %v1330, %v1378
        %v1387 = vmul.f32 %v1331, %v1379
        %v1388 = vmul.f32 %v1380, %v559
        %v1389 = vmul.f32 %v1381, %v559
        %v1390 = vmul.f32 %v1382, %v559
        %v1391 = vmul.f32 %v1383, %v559
        %v1392 = vmul.f32 %v1384, %v564
        %v1393 = vmul.f32 %v1385, %v564
        %v1394 = vmul.f32 %v1386, %v564
        %v1395 = vmul.f32 %v1387, %v564
        %v1396 = vadd.f32 %v1388, %v571
        %v1397 = vadd.f32 %v1389, %v571
        %v1398 = vadd.f32 %v1390, %v571
        %v1399 = vadd.f32 %v1391, %v571
        %v1400 = vadd.f32 %v1392, %v576
        %v1401 = vadd.f32 %v1393, %v576
        %v1402 = vadd.f32 %v1394, %v576
        %v1403 = vadd.f32 %v1395, %v576
        %v1404 = vld [vmem:[%s5] sm:$0xff]
        %v1405 = vld [vmem:[%s5 + $0x8] sm:$0xff]
        %v1406 = vld [vmem:[%s5 + $0x10] sm:$0xff]
        %v1407 = vld [vmem:[%s5 + $0x18] sm:$0xff]
        %v1408 = vpack.c.bf16 %v1405, %v1404
        %v1409 = vpack.c.bf16 %v1407, %v1406
        %v1410 = vpack.c.bf16 %v1400, %v1396
        %v1411 = vpack.c.bf16 %v1401, %v1397
        %v1412 = vpack.c.bf16 %v1402, %v1398
        %v1413 = vpack.c.bf16 %v1403, %v1399
        %v1415 = vsel %vm812, %v1408, 0
        %v1418 = vsel %vm812, %v1409, 0
        %1420 = vmatprep.subr.bf16.mxu0 0
        %1421 = vmatpush1.bf16.msra.mxu0 0
        %1422 = vmatprep.subr.bf16.mxu0 0
        %1423 = vmatpush1.bf16.msra.mxu0 0
        %1424 = vmatprep.subr.bf16.mxu0 0
        %1425 = vmatpush1.bf16.msra.mxu0 0
        %1426 = vmatprep.subr.bf16.mxu0 0
        %1427 = vmatpush1.bf16.msra.mxu0 0
        %1428 = vmatprep.subr.bf16.mxu0 0
        %1429 = vmatpush1.bf16.msra.mxu0 0
        %1430 = vmatprep.subr.bf16.mxu0 0
        %1431 = vmatpush1.bf16.msra.mxu0 0
        %1432 = vmatprep.subr.bf16.mxu0 0
        %1433 = vmatpush1.bf16.msra.mxu0 0
        %1434 = vmatprep.subr.bf16.mxu0 %v1411
        %1435 = vmatpush1.bf16.msra.mxu0 %v1410
        %1436 = vmatprep.subr.bf16.mxu0 0
        %1437 = vmatpush2.bf16.msra.mxu0 0
        %1438 = vmatprep.subr.bf16.mxu0 0
        %1439 = vmatpush2.bf16.msra.mxu0 0
        %1440 = vmatprep.subr.bf16.mxu0 0
        %1441 = vmatpush2.bf16.msra.mxu0 0
        %1442 = vmatprep.subr.bf16.mxu0 0
        %1443 = vmatpush2.bf16.msra.mxu0 0
        %1444 = vmatprep.subr.bf16.mxu0 0
        %1445 = vmatpush2.bf16.msra.mxu0 0
        %1446 = vmatprep.subr.bf16.mxu0 0
        %1447 = vmatpush2.bf16.msra.mxu0 0
        %1448 = vmatprep.subr.bf16.mxu0 0
        %1449 = vmatpush2.bf16.msra.mxu0 0
        %1450 = vmatprep.subr.bf16.mxu0 0
        %1451 = vmatpush2.bf16.msra.mxu0 0
        %1452 = vmatprep.mubr.bf16.mxu0 0
        %1453 = vmatmul.mubr.bf16.gmra.mxu0 %v1415
        %v1454 = vpop.f32.mrf.mxu0
        %v1455 = vadd.f32 %v537, %v1454
        %v1456 = vpop.f32.mrf.mxu0
        %v1457 = vadd.f32 %v537, %v1456
        %v1458 = vpop.f32.mrf.mxu0
        %v1459 = vadd.f32 %v542, %v1458
        %v1460 = vpop.f32.mrf.mxu0
        %v1461 = vadd.f32 %v542, %v1460
        %1462 = vmatprep.mubr.bf16.mxu0 0
        %1463 = vmatmul.mubr.bf16.gmra.mxu0 %v1418
        %v1464 = vpop.f32.mrf.mxu0
        %v1465 = vadd.f32 %v547, %v1464
        %v1466 = vpop.f32.mrf.mxu0
        %v1467 = vadd.f32 %v547, %v1466
        %v1468 = vpop.f32.mrf.mxu0
        %v1469 = vadd.f32 %v552, %v1468
        %v1470 = vpop.f32.mrf.mxu0
        %v1471 = vadd.f32 %v552, %v1470
        %1472 = vdwg.mxu0
        %1473 = vmatprep.subr.bf16.mxu0 0
        %1474 = vmatpush1.bf16.msra.mxu0 0
        %1475 = vmatprep.subr.bf16.mxu0 0
        %1476 = vmatpush1.bf16.msra.mxu0 0
        %1477 = vmatprep.subr.bf16.mxu0 0
        %1478 = vmatpush1.bf16.msra.mxu0 0
        %1479 = vmatprep.subr.bf16.mxu0 0
        %1480 = vmatpush1.bf16.msra.mxu0 0
        %1481 = vmatprep.subr.bf16.mxu0 0
        %1482 = vmatpush1.bf16.msra.mxu0 0
        %1483 = vmatprep.subr.bf16.mxu0 0
        %1484 = vmatpush1.bf16.msra.mxu0 0
        %1485 = vmatprep.subr.bf16.mxu0 0
        %1486 = vmatpush1.bf16.msra.mxu0 0
        %1487 = vmatprep.subr.bf16.mxu0 %v1413
        %1488 = vmatpush1.bf16.msra.mxu0 %v1412
        %1489 = vmatprep.subr.bf16.mxu0 0
        %1490 = vmatpush2.bf16.msra.mxu0 0
        %1491 = vmatprep.subr.bf16.mxu0 0
        %1492 = vmatpush2.bf16.msra.mxu0 0
        %1493 = vmatprep.subr.bf16.mxu0 0
        %1494 = vmatpush2.bf16.msra.mxu0 0
        %1495 = vmatprep.subr.bf16.mxu0 0
        %1496 = vmatpush2.bf16.msra.mxu0 0
        %1497 = vmatprep.subr.bf16.mxu0 0
        %1498 = vmatpush2.bf16.msra.mxu0 0
        %1499 = vmatprep.subr.bf16.mxu0 0
        %1500 = vmatpush2.bf16.msra.mxu0 0
        %1501 = vmatprep.subr.bf16.mxu0 0
        %1502 = vmatpush2.bf16.msra.mxu0 0
        %1503 = vmatprep.subr.bf16.mxu0 0
        %1504 = vmatpush2.bf16.msra.mxu0 0
        %1505 = vmatprep.mubr.bf16.mxu0 0
        %1506 = vmatmul.mubr.bf16.gmra.mxu0 %v1415
        %v1507 = vpop.f32.mrf.mxu0
        %v1508 = vadd.f32 %v537, %v1507
        %v1509 = vpop.f32.mrf.mxu0
        %v1510 = vadd.f32 %v537, %v1509
        %v1511 = vpop.f32.mrf.mxu0
        %v1512 = vadd.f32 %v542, %v1511
        %v1513 = vpop.f32.mrf.mxu0
        %v1514 = vadd.f32 %v542, %v1513
        %1515 = vmatprep.mubr.bf16.mxu0 0
        %1516 = vmatmul.mubr.bf16.gmra.mxu0 %v1418
        %v1517 = vpop.f32.mrf.mxu0
        %v1518 = vadd.f32 %v547, %v1517
        %v1519 = vpop.f32.mrf.mxu0
        %v1520 = vadd.f32 %v547, %v1519
        %v1521 = vpop.f32.mrf.mxu0
        %v1522 = vadd.f32 %v552, %v1521
        %v1523 = vpop.f32.mrf.mxu0
        %v1524 = vadd.f32 %v552, %v1523
        %1525 = vdwg.mxu0
        %v1526 = vmul.f32 %v1455, 0.5
        %v1527 = vmul.f32 %v1457, 0.5
        %v1528 = vmul.f32 %v1508, 0.5
        %v1529 = vmul.f32 %v1510, 0.5
        %v1530 = vmul.f32 %v1459, 0.5
        %v1531 = vmul.f32 %v1461, 0.5
        %v1532 = vmul.f32 %v1512, 0.5
        %v1533 = vmul.f32 %v1514, 0.5
        %v1534 = vmul.f32 %v1465, 0.5
        %v1535 = vmul.f32 %v1467, 0.5
        %v1536 = vmul.f32 %v1518, 0.5
        %v1537 = vmul.f32 %v1520, 0.5
        %v1538 = vmul.f32 %v1469, 0.5
        %v1539 = vmul.f32 %v1471, 0.5
        %v1540 = vmul.f32 %v1522, 0.5
        %v1541 = vmul.f32 %v1524, 0.5
        %v1542 = vmul.f32 %v1455, 0.044715
        %v1543 = vmul.f32 %v1457, 0.044715
        %v1544 = vmul.f32 %v1508, 0.044715
        %v1545 = vmul.f32 %v1510, 0.044715
        %v1546 = vmul.f32 %v1459, 0.044715
        %v1547 = vmul.f32 %v1461, 0.044715
        %v1548 = vmul.f32 %v1512, 0.044715
        %v1549 = vmul.f32 %v1514, 0.044715
        %v1550 = vmul.f32 %v1465, 0.044715
        %v1551 = vmul.f32 %v1467, 0.044715
        %v1552 = vmul.f32 %v1518, 0.044715
        %v1553 = vmul.f32 %v1520, 0.044715
        %v1554 = vmul.f32 %v1469, 0.044715
        %v1555 = vmul.f32 %v1471, 0.044715
        %v1556 = vmul.f32 %v1522, 0.044715
        %v1557 = vmul.f32 %v1524, 0.044715
        %v1558 = vmul.f32 %v1542, %v1455
        %v1559 = vmul.f32 %v1543, %v1457
        %v1560 = vmul.f32 %v1544, %v1508
        %v1561 = vmul.f32 %v1545, %v1510
        %v1562 = vmul.f32 %v1546, %v1459
        %v1563 = vmul.f32 %v1547, %v1461
        %v1564 = vmul.f32 %v1548, %v1512
        %v1565 = vmul.f32 %v1549, %v1514
        %v1566 = vmul.f32 %v1550, %v1465
        %v1567 = vmul.f32 %v1551, %v1467
        %v1568 = vmul.f32 %v1552, %v1518
        %v1569 = vmul.f32 %v1553, %v1520
        %v1570 = vmul.f32 %v1554, %v1469
        %v1571 = vmul.f32 %v1555, %v1471
        %v1572 = vmul.f32 %v1556, %v1522
        %v1573 = vmul.f32 %v1557, %v1524
        %v1574 = vmul.f32 %v1558, %v1455
        %v1575 = vmul.f32 %v1559, %v1457
        %v1576 = vmul.f32 %v1560, %v1508
        %v1577 = vmul.f32 %v1561, %v1510
        %v1578 = vmul.f32 %v1562, %v1459
        %v1579 = vmul.f32 %v1563, %v1461
        %v1580 = vmul.f32 %v1564, %v1512
        %v1581 = vmul.f32 %v1565, %v1514
        %v1582 = vmul.f32 %v1566, %v1465
        %v1583 = vmul.f32 %v1567, %v1467
        %v1584 = vmul.f32 %v1568, %v1518
        %v1585 = vmul.f32 %v1569, %v1520
        %v1586 = vmul.f32 %v1570, %v1469
        %v1587 = vmul.f32 %v1571, %v1471
        %v1588 = vmul.f32 %v1572, %v1522
        %v1589 = vmul.f32 %v1573, %v1524
        %v1590 = vadd.f32 %v1455, %v1574
        %v1591 = vadd.f32 %v1457, %v1575
        %v1592 = vadd.f32 %v1508, %v1576
        %v1593 = vadd.f32 %v1510, %v1577
        %v1594 = vadd.f32 %v1459, %v1578
        %v1595 = vadd.f32 %v1461, %v1579
        %v1596 = vadd.f32 %v1512, %v1580
        %v1597 = vadd.f32 %v1514, %v1581
        %v1598 = vadd.f32 %v1465, %v1582
        %v1599 = vadd.f32 %v1467, %v1583
        %v1600 = vadd.f32 %v1518, %v1584
        %v1601 = vadd.f32 %v1520, %v1585
        %v1602 = vadd.f32 %v1469, %v1586
        %v1603 = vadd.f32 %v1471, %v1587
        %v1604 = vadd.f32 %v1522, %v1588
        %v1605 = vadd.f32 %v1524, %v1589
        %v1606 = vmul.f32 %v1590, 0.7978846
        %v1607 = vmul.f32 %v1591, 0.7978846
        %v1608 = vmul.f32 %v1592, 0.7978846
        %v1609 = vmul.f32 %v1593, 0.7978846
        %v1610 = vmul.f32 %v1594, 0.7978846
        %v1611 = vmul.f32 %v1595, 0.7978846
        %v1612 = vmul.f32 %v1596, 0.7978846
        %v1613 = vmul.f32 %v1597, 0.7978846
        %v1614 = vmul.f32 %v1598, 0.7978846
        %v1615 = vmul.f32 %v1599, 0.7978846
        %v1616 = vmul.f32 %v1600, 0.7978846
        %v1617 = vmul.f32 %v1601, 0.7978846
        %v1618 = vmul.f32 %v1602, 0.7978846
        %v1619 = vmul.f32 %v1603, 0.7978846
        %v1620 = vmul.f32 %v1604, 0.7978846
        %v1621 = vmul.f32 %v1605, 0.7978846
        %v1622 = vtanh.pop %v1606
        %v1623 = vtanh.pop %v1607
        %v1624 = vtanh.pop %v1608
        %v1625 = vtanh.pop %v1609
        %v1626 = vtanh.pop %v1610
        %v1627 = vtanh.pop %v1611
        %v1628 = vtanh.pop %v1612
        %v1629 = vtanh.pop %v1613
        %v1630 = vtanh.pop %v1614
        %v1631 = vtanh.pop %v1615
        %v1632 = vtanh.pop %v1616
        %v1633 = vtanh.pop %v1617
        %v1634 = vtanh.pop %v1618
        %v1635 = vtanh.pop %v1619
        %v1636 = vtanh.pop %v1620
        %v1637 = vtanh.pop %v1621
        %v1638 = vadd.f32 %v1622, 1.0
        %v1639 = vadd.f32 %v1623, 1.0
        %v1640 = vadd.f32 %v1624, 1.0
        %v1641 = vadd.f32 %v1625, 1.0
        %v1642 = vadd.f32 %v1626, 1.0
        %v1643 = vadd.f32 %v1627, 1.0
        %v1644 = vadd.f32 %v1628, 1.0
        %v1645 = vadd.f32 %v1629, 1.0
        %v1646 = vadd.f32 %v1630, 1.0
        %v1647 = vadd.f32 %v1631, 1.0
        %v1648 = vadd.f32 %v1632, 1.0
        %v1649 = vadd.f32 %v1633, 1.0
        %v1650 = vadd.f32 %v1634, 1.0
        %v1651 = vadd.f32 %v1635, 1.0
        %v1652 = vadd.f32 %v1636, 1.0
        %v1653 = vadd.f32 %v1637, 1.0
        %v1654 = vmul.f32 %v1526, %v1638
        %v1655 = vmul.f32 %v1527, %v1639
        %v1656 = vmul.f32 %v1528, %v1640
        %v1657 = vmul.f32 %v1529, %v1641
        %v1658 = vmul.f32 %v1530, %v1642
        %v1659 = vmul.f32 %v1531, %v1643
        %v1660 = vmul.f32 %v1532, %v1644
        %v1661 = vmul.f32 %v1533, %v1645
        %v1662 = vmul.f32 %v1534, %v1646
        %v1663 = vmul.f32 %v1535, %v1647
        %v1664 = vmul.f32 %v1536, %v1648
        %v1665 = vmul.f32 %v1537, %v1649
        %v1666 = vmul.f32 %v1538, %v1650
        %v1667 = vmul.f32 %v1539, %v1651
        %v1668 = vmul.f32 %v1540, %v1652
        %v1669 = vmul.f32 %v1541, %v1653
        %v1670 = vadd.f32 %v1654, %v463
        %v1671 = vadd.f32 %v1655, %v468
        %v1672 = vadd.f32 %v1656, %v473
        %v1673 = vadd.f32 %v1657, %v478
        %v1674 = vadd.f32 %v1658, %v464
        %v1675 = vadd.f32 %v1659, %v469
        %v1676 = vadd.f32 %v1660, %v474
        %v1677 = vadd.f32 %v1661, %v479
        %v1678 = vadd.f32 %v1662, %v465
        %v1679 = vadd.f32 %v1663, %v470
        %v1680 = vadd.f32 %v1664, %v475
        %v1681 = vadd.f32 %v1665, %v480
        %v1682 = vadd.f32 %v1666, %v466
        %v1683 = vadd.f32 %v1667, %v471
        %v1684 = vadd.f32 %v1668, %v476
        %v1685 = vadd.f32 %v1669, %v481
        %v1686 = vadd.f32 %v1670, %v1674
        %v1687 = vadd.f32 %v1686, %v1678
        %v1688 = vadd.f32 %v1687, %v1682
        %v1689 = vrot.slane %v1688, 4
        %v1690 = vadd.f32 %v1688, %v1689
        %v1691 = vrot.slane %v1690, 2
        %v1692 = vadd.f32 %v1690, %v1691
        %v1693 = vrot.slane %v1692, 1
        %v1694 = vadd.f32 %v1692, %v1693
        %v1695 = vadd.f32 %v1671, %v1675
        %v1696 = vadd.f32 %v1695, %v1679
        %v1697 = vadd.f32 %v1696, %v1683
        %v1698 = vrot.slane %v1697, 4
        %v1699 = vadd.f32 %v1697, %v1698
        %v1700 = vrot.slane %v1699, 2
        %v1701 = vadd.f32 %v1699, %v1700
        %v1702 = vrot.slane %v1701, 1
        %v1703 = vadd.f32 %v1701, %v1702
        %v1704 = vadd.f32 %v1672, %v1676
        %v1705 = vadd.f32 %v1704, %v1680
        %v1706 = vadd.f32 %v1705, %v1684
        %v1707 = vrot.slane %v1706, 4
        %v1708 = vadd.f32 %v1706, %v1707
        %v1709 = vrot.slane %v1708, 2
        %v1710 = vadd.f32 %v1708, %v1709
        %v1711 = vrot.slane %v1710, 1
        %v1712 = vadd.f32 %v1710, %v1711
        %v1713 = vadd.f32 %v1673, %v1677
        %v1714 = vadd.f32 %v1713, %v1681
        %v1715 = vadd.f32 %v1714, %v1685
        %v1716 = vrot.slane %v1715, 4
        %v1717 = vadd.f32 %v1715, %v1716
        %v1718 = vrot.slane %v1717, 2
        %v1719 = vadd.f32 %v1717, %v1718
        %v1720 = vrot.slane %v1719, 1
        %v1721 = vadd.f32 %v1719, %v1720
        %v1722 = vrcp.pop 32.0
        %v1723 = vmul.f32 %v1694, %v1722
        %v1724 = vmul.f32 %v1703, %v1722
        %v1725 = vmul.f32 %v1712, %v1722
        %v1726 = vmul.f32 %v1721, %v1722
        %v1727 = vsub.f32 %v1670, %v1723
        %v1728 = vsub.f32 %v1671, %v1724
        %v1729 = vsub.f32 %v1672, %v1725
        %v1730 = vsub.f32 %v1673, %v1726
        %v1731 = vsub.f32 %v1674, %v1723
        %v1732 = vsub.f32 %v1675, %v1724
        %v1733 = vsub.f32 %v1676, %v1725
        %v1734 = vsub.f32 %v1677, %v1726
        %v1735 = vsub.f32 %v1678, %v1723
        %v1736 = vsub.f32 %v1679, %v1724
        %v1737 = vsub.f32 %v1680, %v1725
        %v1738 = vsub.f32 %v1681, %v1726
        %v1739 = vsub.f32 %v1682, %v1723
        %v1740 = vsub.f32 %v1683, %v1724
        %v1741 = vsub.f32 %v1684, %v1725
        %v1742 = vsub.f32 %v1685, %v1726
        %v1743 = vmul.f32 %v1727, %v1727
        %v1744 = vmul.f32 %v1728, %v1728
        %v1745 = vmul.f32 %v1729, %v1729
        %v1746 = vmul.f32 %v1730, %v1730
        %v1747 = vmul.f32 %v1731, %v1731
        %v1748 = vmul.f32 %v1732, %v1732
        %v1749 = vmul.f32 %v1733, %v1733
        %v1750 = vmul.f32 %v1734, %v1734
        %v1751 = vmul.f32 %v1735, %v1735
        %v1752 = vmul.f32 %v1736, %v1736
        %v1753 = vmul.f32 %v1737, %v1737
        %v1754 = vmul.f32 %v1738, %v1738
        %v1755 = vmul.f32 %v1739, %v1739
        %v1756 = vmul.f32 %v1740, %v1740
        %v1757 = vmul.f32 %v1741, %v1741
        %v1758 = vmul.f32 %v1742, %v1742
        %v1759 = vadd.f32 %v1743, %v1747
        %v1760 = vadd.f32 %v1759, %v1751
        %v1761 = vadd.f32 %v1760, %v1755
        %v1762 = vrot.slane %v1761, 4
        %v1763 = vadd.f32 %v1761, %v1762
        %v1764 = vrot.slane %v1763, 2
        %v1765 = vadd.f32 %v1763, %v1764
        %v1766 = vrot.slane %v1765, 1
        %v1767 = vadd.f32 %v1765, %v1766
        %v1768 = vadd.f32 %v1744, %v1748
        %v1769 = vadd.f32 %v1768, %v1752
        %v1770 = vadd.f32 %v1769, %v1756
        %v1771 = vrot.slane %v1770, 4
        %v1772 = vadd.f32 %v1770, %v1771
        %v1773 = vrot.slane %v1772, 2
        %v1774 = vadd.f32 %v1772, %v1773
        %v1775 = vrot.slane %v1774, 1
        %v1776 = vadd.f32 %v1774, %v1775
        %v1777 = vadd.f32 %v1745, %v1749
        %v1778 = vadd.f32 %v1777, %v1753
        %v1779 = vadd.f32 %v1778, %v1757
        %v1780 = vrot.slane %v1779, 4
        %v1781 = vadd.f32 %v1779, %v1780
        %v1782 = vrot.slane %v1781, 2
        %v1783 = vadd.f32 %v1781, %v1782
        %v1784 = vrot.slane %v1783, 1
        %v1785 = vadd.f32 %v1783, %v1784
        %v1786 = vadd.f32 %v1746, %v1750
        %v1787 = vadd.f32 %v1786, %v1754
        %v1788 = vadd.f32 %v1787, %v1758
        %v1789 = vrot.slane %v1788, 4
        %v1790 = vadd.f32 %v1788, %v1789
        %v1791 = vrot.slane %v1790, 2
        %v1792 = vadd.f32 %v1790, %v1791
        %v1793 = vrot.slane %v1792, 1
        %v1794 = vadd.f32 %v1792, %v1793
        %v1795 = vmul.f32 %v1767, %v1722
        %v1796 = vmul.f32 %v1776, %v1722
        %v1797 = vmul.f32 %v1785, %v1722
        %v1798 = vmul.f32 %v1794, %v1722
        %v1799 = vadd.f32 %v1795, 1e-05
        %v1800 = vadd.f32 %v1796, 1e-05
        %v1801 = vadd.f32 %v1797, 1e-05
        %v1802 = vadd.f32 %v1798, 1e-05
        %v1803 = vrsqrt.pop %v1799
        %v1804 = vrsqrt.pop %v1800
        %v1805 = vrsqrt.pop %v1801
        %v1806 = vrsqrt.pop %v1802
        %v1807 = vmul.f32 %v1727, %v1803
        %v1808 = vmul.f32 %v1728, %v1804
        %v1809 = vmul.f32 %v1729, %v1805
        %v1810 = vmul.f32 %v1730, %v1806
        %v1811 = vmul.f32 %v1731, %v1803
        %v1812 = vmul.f32 %v1732, %v1804
        %v1813 = vmul.f32 %v1733, %v1805
        %v1814 = vmul.f32 %v1734, %v1806
        %v1815 = vmul.f32 %v1735, %v1803
        %v1816 = vmul.f32 %v1736, %v1804
        %v1817 = vmul.f32 %v1737, %v1805
        %v1818 = vmul.f32 %v1738, %v1806
        %v1819 = vmul.f32 %v1739, %v1803
        %v1820 = vmul.f32 %v1740, %v1804
        %v1821 = vmul.f32 %v1741, %v1805
        %v1822 = vmul.f32 %v1742, %v1806
        %v1823 = vmul.f32 %v1807, %v585
        %v1824 = vmul.f32 %v1808, %v585
        %v1825 = vmul.f32 %v1809, %v585
        %v1826 = vmul.f32 %v1810, %v585
        %v1827 = vmul.f32 %v1811, %v590
        %v1828 = vmul.f32 %v1812, %v590
        %v1829 = vmul.f32 %v1813, %v590
        %v1830 = vmul.f32 %v1814, %v590
        %v1831 = vmul.f32 %v1815, %v595
        %v1832 = vmul.f32 %v1816, %v595
        %v1833 = vmul.f32 %v1817, %v595
        %v1834 = vmul.f32 %v1818, %v595
        %v1835 = vmul.f32 %v1819, %v600
        %v1836 = vmul.f32 %v1820, %v600
        %v1837 = vmul.f32 %v1821, %v600
        %v1838 = vmul.f32 %v1822, %v600
        %v1839 = vadd.f32 %v1823, %v609
        %v1840 = vadd.f32 %v1824, %v609
        %v1841 = vadd.f32 %v1825, %v609
        %v1842 = vadd.f32 %v1826, %v609
        %v1843 = vadd.f32 %v1827, %v614
        %v1844 = vadd.f32 %v1828, %v614
        %v1845 = vadd.f32 %v1829, %v614
        %v1846 = vadd.f32 %v1830, %v614
        %v1847 = vadd.f32 %v1831, %v619
        %v1848 = vadd.f32 %v1832, %v619
        %v1849 = vadd.f32 %v1833, %v619
        %v1850 = vadd.f32 %v1834, %v619
        %v1851 = vadd.f32 %v1835, %v624
        %v1852 = vadd.f32 %v1836, %v624
        %v1853 = vadd.f32 %v1837, %v624
        %v1854 = vadd.f32 %v1838, %v624
        %v1855 = vadd.f32 %v1839, %v1840
        %v1856 = vadd.f32 %v1843, %v1844
        %v1857 = vadd.f32 %v1847, %v1848
        %v1858 = vadd.f32 %v1851, %v1852
        %v1859 = vadd.f32 %v1855, %v1841
        %v1860 = vadd.f32 %v1856, %v1845
        %v1861 = vadd.f32 %v1857, %v1849
        %v1862 = vadd.f32 %v1858, %v1853
        %v1863 = vadd.f32 %v1859, %v1842
        %v1864 = vadd.f32 %v1860, %v1846
        %v1865 = vadd.f32 %v1861, %v1850
        %v1866 = vadd.f32 %v1862, %v1854
        %v1867 = vmul.f32 %v1863, 0.25
        %v1868 = vmul.f32 %v1864, 0.25
        %v1869 = vmul.f32 %v1865, 0.25
        %v1870 = vmul.f32 %v1866, 0.25
        %1871 = vst [vmem:[%s454] sm:$0xff] %v1867
        %1872 = vst [vmem:[%s454 + $0x8] sm:$0xff] %v1868
        %1873 = vst [vmem:[%s454 + $0x10] sm:$0xff] %v1869
        %1874 = vst [vmem:[%s454 + $0x18] sm:$0xff] %v1870
        %s1875 = sand.u32 %s293, 1
        %s1876 = scalar_lea.sflag [#allocation4], %s1875
        %s1877 = sand.u32 %s293, 1
        %s1878 = smul.addr %s1877, 32
        %s1879 = scalar_lea.vmem [#allocation5], %s1878
        %s1880 = sand.u32 %s321, 1
        %s1881 = scalar_lea.sflag [#allocation7], %s1880
        %s1882 = sand.u32 %s321, 1
        %s1883 = smul.addr %s1882, 16
        %s1884 = scalar_lea.vmem [#allocation6], %s1883
        // Predicated region
        $region69: #{tpu_custom_call.1} parent=63 // pred_check
          %p1885 = pneg %p303
        $region70: #{tpu_custom_call.1} parent=63 // pred_check_branch
          %1887 = sbr.rel (%p1885) target = $region72
        $region71: #{tpu_custom_call.1} parent=63 // pred_region
          %s1889 = ssub.s32 512, 512
          %1890 = vsyncadd %s1876, %s1889
          %s1891 = smul.addr %s37, 8
          %s1892 = sadd.s32 %s38, %s1891
          %s1893 = smul.addr %s1892, 128
          %s1894 = scalar_lea.hbm %s11, %s1893
          %s1895 = sshll.u32 %s1879, 4
          %s1896 = int_to_ptr.vmem [resolvable:$true] %s1895
          %1901 = dma.vmem_to_hbm [thread:$0]  %s1896, 512, %s1894, %s1876, 128, 256, 8
        $region72: #{tpu_custom_call.1} parent=63 // pred_fallthru
          _
        // Predicated region
        $region73: #{tpu_custom_call.1} parent=63 // pred_check
          %p1902 = pneg %p331
        $region74: #{tpu_custom_call.1} parent=63 // pred_check_branch
          %1904 = sbr.rel (%p1902) target = $region76
        $region75: #{tpu_custom_call.1} parent=63 // pred_region
          %s1906 = ssub.s32 256, 256
          %1907 = vsyncadd %s1881, %s1906
          %s1908 = smul.addr %s37, 4
          %s1909 = sadd.s32 %s38, %s1908
          %s1910 = smul.addr %s1909, 128
          %s1911 = scalar_lea.hbm %s12, %s1910
          %s1912 = sshll.u32 %s1884, 4
          %s1913 = int_to_ptr.vmem [resolvable:$true] %s1912
          %1918 = dma.vmem_to_hbm [thread:$0]  %s1913, 256, %s1911, %s1881, 128, 256, 8
        $region76: #{tpu_custom_call.1} parent=63 // pred_fallthru
          _
      $region64: #{tpu_custom_call.1} parent=5 // pred_fallthru
        _
      %p1919 = scmp.le.s32.totalorder 2, %s28
      // Predicated region
      $region77: #{tpu_custom_call.1} parent=5 // pred_check
        %p1920 = pneg %p1919
      $region78: #{tpu_custom_call.1} parent=5 // pred_check_branch
        %1922 = sbr.rel (%p1920) target = $region80
      $region79: #{tpu_custom_call.1} parent=5 // pred_region
        %s1923 = ssub.s32 %s28, 2
        // Predicated region
        $region81: #{tpu_custom_call.1} parent=79 // pred_check
          %p1924 = pneg %p309
        $region82: #{tpu_custom_call.1} parent=79 // pred_check_branch
          %1926 = sbr.rel (%p1924) target = $region84
        $region83: #{tpu_custom_call.1} parent=79 // pred_region
          %s1927 = sand.u32 %s294, 1
          %s1928 = scalar_lea.sflag [#allocation4], %s1927
          %s1929 = sand.u32 %s294, 1
          %s1930 = smul.addr %s1929, 32
          %s1931 = scalar_lea.vmem [#allocation5], %s1930
          %1932 = dma.done %s1928, 512
        $region84: #{tpu_custom_call.1} parent=79 // pred_fallthru
          _
        // Predicated region
        $region85: #{tpu_custom_call.1} parent=79 // pred_check
          %p1933 = pneg %p337
        $region86: #{tpu_custom_call.1} parent=79 // pred_check_branch
          %1935 = sbr.rel (%p1933) target = $region88
        $region87: #{tpu_custom_call.1} parent=79 // pred_region
          %s1936 = sand.u32 %s322, 1
          %s1937 = scalar_lea.sflag [#allocation7], %s1936
          %s1938 = sand.u32 %s322, 1
          %s1939 = smul.addr %s1938, 16
          %s1940 = scalar_lea.vmem [#allocation6], %s1939
          %1941 = dma.done %s1937, 256
        $region88: #{tpu_custom_call.1} parent=79 // pred_fallthru
          _
      $region80: #{tpu_custom_call.1} parent=5 // pred_fallthru
        _
    $region6: #{tpu_custom_call.1} parent=1 // loop_footer
      %s32 = sadd.s32 1, %s28
    $region7: #{tpu_custom_call.1} parent=1 // loop_footer_branch
      %27 = sbr.rel target = $region3
    $region8: #{tpu_custom_call.1} parent=1 // loop_exit
      _
    %1942 = vsyncpa [#allocation3], 1
    %s1943 = scalar_lea.sflag [#allocation3], 1
    %1944 = vsyncpa %s1943, 1
    %1945 = vsyncpa [#allocation4], 1
    %s1946 = scalar_lea.sflag [#allocation4], 1
    %1947 = vsyncpa %s1946, 1
    %1948 = vsyncpa [#allocation7], 1
    %s1949 = scalar_lea.sflag [#allocation7], 1
    %1950 = vsyncpa %s1949, 1

</llo_original>
